<compile_context>
chip_gen: v7x
topology: tpu7x:2x2x1
jax: 0.10.0
libtpu: 0.0.40
codegen_flags: <defaults>
</compile_context>

<pallas_src>
import math

import jax
import jax.numpy as jnp
from jax import lax
from jax.experimental import pallas as pl
from jax.experimental.pallas import tpu as pltpu

K = 3          # kernel_size
PAD = 1        # padding
EPS = 1e-5     # BatchNorm2d default eps
LANES = 128    # channel block = one full lane width
# TODO(synk): stride is fixed to 1 (the module default); other strides not implemented.
# TODO(synk): BatchNorm running_mean/running_var buffer updates are not produced
#             (forward activations only).
# TODO(synk): for tiny C (e.g. 4) the pad to 128 lanes wastes bandwidth; a real
#             small-C workload should pack W-tiles into the lane axis instead.


def _dwconv_kernel(x_ref, w_ref, y_ref, s1_ref, s2_ref):
    """Depthwise 3x3 conv over one (batch element, 128-channel block) of the
    spatially pre-padded NHWC input; also emits per-channel partial sum / sumsq
    of the conv output for the two-phase BatchNorm."""
    _, Hp, Wp, CB = x_ref.shape
    H, W = Hp - 2 * PAD, Wp - 2 * PAD

    # Per-channel taps, hoisted once (per-lane vectors -> pure VPU multiply-adds).
    w = w_ref[...].astype(jnp.float32)                        # (9, CB)
    taps = [w[t].reshape(1, 1, 1, CB) for t in range(K * K)]

    # Row strips bound the accumulator live range (no full-slab RMW per tap).
    TH = math.gcd(H, 8)
    nstrips = H // TH

    def strip(i, carry):
        s1, s2 = carry
        h0 = pl.multiple_of(i * TH, TH)
        # (TH + 2)-row window of the padded input; the W halo is already baked in.
        xs = x_ref[:, pl.ds(h0, TH + 2 * PAD), :, :].astype(jnp.float32)
        # Hoist the sublane (W) shift: 3 column-aligned views reused by 3 row taps each.
        cols = [xs[:, :, kw:kw + W, :] for kw in range(K)]
        acc = jnp.zeros((1, TH, W, CB), jnp.float32)
        for kh in range(K):
            for kw in range(K):
                acc = acc + cols[kw][:, kh:kh + TH, :, :] * taps[kh * K + kw]
        y_ref[:, pl.ds(h0, TH), :, :] = acc.astype(y_ref.dtype)
        s1 = s1 + jnp.sum(acc, axis=(1, 2))                   # (1, CB) per-lane stats
        s2 = s2 + jnp.sum(acc * acc, axis=(1, 2))
        return s1, s2

    init = (jnp.zeros((1, CB), jnp.float32), jnp.zeros((1, CB), jnp.float32))
    s1, s2 = lax.fori_loop(0, nstrips, strip, init, unroll=(nstrips <= 8))
    s1_ref[...] = s1.reshape(s1_ref.shape)
    s2_ref[...] = s2.reshape(s2_ref.shape)


def _bn_relu_kernel(y_ref, scale_ref, shift_ref, o_ref):
    """Elementwise per-channel affine (BatchNorm with precomputed scale/shift) + ReLU."""
    scale = scale_ref[...].astype(jnp.float32).reshape(1, 1, 1, -1)
    shift = shift_ref[...].astype(jnp.float32).reshape(1, 1, 1, -1)
    y = y_ref[...].astype(jnp.float32)
    o_ref[...] = jnp.maximum(y * scale + shift, 0.0).astype(o_ref.dtype)


def depthwise_conv_forward(x, weight, gamma, beta):
    """x: (N, C, H, W); weight: (C, 1, K, K); gamma/beta: (C,). Returns (N, C, H, W)."""
    N, C, H, W = x.shape
    Cp = ((C + LANES - 1) // LANES) * LANES
    Hp, Wp = H + 2 * PAD, W + 2 * PAD
    cblocks = Cp // LANES
    itemsize = x.dtype.itemsize

    # NCHW -> lane-dense NHWC; spatial zero halo and channel-lane padding folded into
    # a single wrapper-side pad (XLA fuses it), so no in-kernel halo build is needed.
    x_p = jnp.pad(jnp.transpose(x, (0, 2, 3, 1)),
                  ((0, 0), (PAD, PAD), (PAD, PAD), (0, Cp - C)))
    w2 = jnp.pad(weight.reshape(C, K * K).T, ((0, 0), (0, Cp - C)))    # (9, Cp)

    in_blk = Hp * Wp * LANES * itemsize
    out_blk = H * W * LANES * itemsize
    # Explicit scoped-VMEM budgets: double-buffered in/out blocks + working-set headroom.
    vmem_conv = min(4 * (in_blk + out_blk) + (8 << 20), 64 << 20)
    vmem_bn = min(8 * out_blk + (8 << 20), 64 << 20)

    # Pass 1: depthwise conv + per-(batch, channel-block) partial BN statistics.
    y, ps1, ps2 = pl.pallas_call(
        _dwconv_kernel,
        out_shape=(jax.ShapeDtypeStruct((N, H, W, Cp), x.dtype),
                   jax.ShapeDtypeStruct((N, 1, Cp), jnp.float32),
                   jax.ShapeDtypeStruct((N, 1, Cp), jnp.float32)),
        grid=(cblocks, N),
        in_specs=[
            pl.BlockSpec((1, Hp, Wp, LANES), lambda c, n: (n, 0, 0, c)),  # padded slab
            pl.BlockSpec((K * K, LANES), lambda c, n: (0, c)),            # per-channel taps
        ],
        out_specs=(
            pl.BlockSpec((1, H, W, LANES), lambda c, n: (n, 0, 0, c)),    # conv output
            pl.BlockSpec((1, 1, LANES), lambda c, n: (n, 0, c)),          # partial sum
            pl.BlockSpec((1, 1, LANES), lambda c, n: (n, 0, c)),          # partial sumsq
        ),
        compiler_params=pltpu.CompilerParams(
            dimension_semantics=("parallel", "parallel"),
            vmem_limit_bytes=vmem_conv),
        cost_estimate=pl.CostEstimate(
            flops=18 * N * H * W * Cp, transcendentals=0,
            bytes_accessed=x_p.size * itemsize + N * H * W * Cp * itemsize),
    )(x_p, w2)

    # Combine partial stats (tiny per-channel math) into the BN affine parameters.
    cnt = float(N * H * W)
    mean = jnp.sum(ps1, axis=0) / cnt                                   # (1, Cp)
    var = jnp.maximum(jnp.sum(ps2, axis=0) / cnt - mean * mean, 0.0)    # biased, as PyTorch
    g2 = jnp.pad(gamma, (0, Cp - C)).reshape(1, Cp).astype(jnp.float32)
    b2 = jnp.pad(beta, (0, Cp - C)).reshape(1, Cp).astype(jnp.float32)
    scale = g2 * lax.rsqrt(var + EPS)
    shift = b2 - mean * scale

    # Pass 2: cheap elementwise BN-affine + ReLU.
    out_t = pl.pallas_call(
        _bn_relu_kernel,
        out_shape=jax.ShapeDtypeStruct((N, H, W, Cp), x.dtype),
        grid=(cblocks, N),
        in_specs=[
            pl.BlockSpec((1, H, W, LANES), lambda c, n: (n, 0, 0, c)),
            pl.BlockSpec((1, LANES), lambda c, n: (0, c)),
            pl.BlockSpec((1, LANES), lambda c, n: (0, c)),
        ],
        out_specs=pl.BlockSpec((1, H, W, LANES), lambda c, n: (n, 0, 0, c)),
        compiler_params=pltpu.CompilerParams(
            dimension_semantics=("parallel", "parallel"),
            vmem_limit_bytes=vmem_bn),
        cost_estimate=pl.CostEstimate(
            flops=3 * N * H * W * Cp, transcendentals=0,
            bytes_accessed=2 * N * H * W * Cp * itemsize),
    )(y, scale, shift)

    return jnp.transpose(out_t[..., :C], (0, 3, 1, 2))


def _reference(x, weight, gamma, beta):
    C = x.shape[1]
    y = lax.conv_general_dilated(
        x, weight, window_strides=(1, 1), padding=((PAD, PAD), (PAD, PAD)),
        dimension_numbers=("NCHW", "OIHW", "NCHW"), feature_group_count=C)
    mean = jnp.mean(y, axis=(0, 2, 3), keepdims=True)
    var = jnp.mean((y - mean) ** 2, axis=(0, 2, 3), keepdims=True)
    yn = (y - mean) * lax.rsqrt(var + EPS)
    yn = yn * gamma.reshape(1, -1, 1, 1) + beta.reshape(1, -1, 1, 1)
    return jnp.maximum(yn, 0.0)


if __name__ == "__main__":
    N, C, H, W = 2, 4, 16, 16                  # in_channels = out_channels = 4 (depthwise)
    key = jax.random.PRNGKey(0)
    kx, kw = jax.random.split(key)

    x = jax.random.normal(kx, (N, C, H, W), dtype=jnp.float32)
    weight = jax.random.normal(kw, (C, 1, K, K), dtype=jnp.float32) * 0.5  # Conv2d weight
    gamma = jnp.ones((C,), dtype=jnp.float32)                              # BN default init
    beta = jnp.zeros((C,), dtype=jnp.float32)

    out = jax.block_until_ready(depthwise_conv_forward(x, weight, gamma, beta))

    ref = _reference(x, weight, gamma, beta)
    assert out.shape == (N, C, H, W)
    # 1e-3 tolerance: single-pass batch stats (E[x^2]-mean^2) differ from the two-pass
    # reference only by accumulation-order ULPs; validated well inside this bound.
    assert jnp.allclose(out, ref, atol=1e-3, rtol=1e-3), "mismatch vs reference"
    print("KERNEL_OK")
</pallas_src>

<mosaic_0001>
module attributes {stable_mosaic.version = 11 : i64} {
  func.func @_dwconv_kernel(%arg0: i32, %arg1: i32, %arg2: memref<1x18x18x128xf32, #tpu.memory_space<vmem>>, %arg3: memref<9x128xf32, #tpu.memory_space<vmem>>, %arg4: memref<1x16x16x128xf32, #tpu.memory_space<vmem>>, %arg5: memref<1x1x128xf32, #tpu.memory_space<vmem>>, %arg6: memref<1x1x128xf32, #tpu.memory_space<vmem>>) attributes {dimension_semantics = [#tpu.dimension_semantics<parallel>, #tpu.dimension_semantics<parallel>], iteration_bounds = array<i64: 1, 2>, scalar_prefetch = 0 : i64, scratch_operands = 0 : i64, tpu.core_type = #tpu.core_type<tc>, window_params = [{transform_indices = @transform_0, window_bounds = array<i64: 1, 18, 18, 128>}, {transform_indices = @transform_1, window_bounds = array<i64: 9, 128>}, {transform_indices = @transform_2, window_bounds = array<i64: 1, 16, 16, 128>}, {transform_indices = @transform_3, window_bounds = array<i64: 1, 1, 128>}, {transform_indices = @transform_4, window_bounds = array<i64: 1, 1, 128>}]} {
    %c0 = arith.constant 0 : index
    %c0_0 = arith.constant 0 : index
    %0 = vector.load %arg3[%c0, %c0_0] : memref<9x128xf32, #tpu.memory_space<vmem>>, vector<9x128xf32>
    %1 = vector.extract_strided_slice %0 {offsets = [0, 0], sizes = [1, 128], strides = [1, 1]} : vector<9x128xf32> to vector<1x128xf32>
    %2 = vector.shape_cast %1 : vector<1x128xf32> to vector<128xf32>
    %3 = vector.shape_cast %2 : vector<128xf32> to vector<1x1x1x128xf32>
    %4 = vector.extract_strided_slice %0 {offsets = [1, 0], sizes = [1, 128], strides = [1, 1]} : vector<9x128xf32> to vector<1x128xf32>
    %5 = vector.shape_cast %4 : vector<1x128xf32> to vector<128xf32>
    %6 = vector.shape_cast %5 : vector<128xf32> to vector<1x1x1x128xf32>
    %7 = vector.extract_strided_slice %0 {offsets = [2, 0], sizes = [1, 128], strides = [1, 1]} : vector<9x128xf32> to vector<1x128xf32>
    %8 = vector.shape_cast %7 : vector<1x128xf32> to vector<128xf32>
    %9 = vector.shape_cast %8 : vector<128xf32> to vector<1x1x1x128xf32>
    %10 = vector.extract_strided_slice %0 {offsets = [3, 0], sizes = [1, 128], strides = [1, 1]} : vector<9x128xf32> to vector<1x128xf32>
    %11 = vector.shape_cast %10 : vector<1x128xf32> to vector<128xf32>
    %12 = vector.shape_cast %11 : vector<128xf32> to vector<1x1x1x128xf32>
    %13 = vector.extract_strided_slice %0 {offsets = [4, 0], sizes = [1, 128], strides = [1, 1]} : vector<9x128xf32> to vector<1x128xf32>
    %14 = vector.shape_cast %13 : vector<1x128xf32> to vector<128xf32>
    %15 = vector.shape_cast %14 : vector<128xf32> to vector<1x1x1x128xf32>
    %16 = vector.extract_strided_slice %0 {offsets = [5, 0], sizes = [1, 128], strides = [1, 1]} : vector<9x128xf32> to vector<1x128xf32>
    %17 = vector.shape_cast %16 : vector<1x128xf32> to vector<128xf32>
    %18 = vector.shape_cast %17 : vector<128xf32> to vector<1x1x1x128xf32>
    %19 = vector.extract_strided_slice %0 {offsets = [6, 0], sizes = [1, 128], strides = [1, 1]} : vector<9x128xf32> to vector<1x128xf32>
    %20 = vector.shape_cast %19 : vector<1x128xf32> to vector<128xf32>
    %21 = vector.shape_cast %20 : vector<128xf32> to vector<1x1x1x128xf32>
    %22 = vector.extract_strided_slice %0 {offsets = [7, 0], sizes = [1, 128], strides = [1, 1]} : vector<9x128xf32> to vector<1x128xf32>
    %23 = vector.shape_cast %22 : vector<1x128xf32> to vector<128xf32>
    %24 = vector.shape_cast %23 : vector<128xf32> to vector<1x1x1x128xf32>
    %25 = vector.extract_strided_slice %0 {offsets = [8, 0], sizes = [1, 128], strides = [1, 1]} : vector<9x128xf32> to vector<1x128xf32>
    %26 = vector.shape_cast %25 : vector<1x128xf32> to vector<128xf32>
    %27 = vector.shape_cast %26 : vector<128xf32> to vector<1x1x1x128xf32>
    %cst = arith.constant 0.000000e+00 : f32
    %28 = vector.broadcast %cst : f32 to vector<1x128xf32>
    %cst_1 = arith.constant 0.000000e+00 : f32
    %29 = vector.broadcast %cst_1 : f32 to vector<1x128xf32>
    %c0_i32 = arith.constant 0 : i32
    %c8_i32 = arith.constant 8 : i32
    %30 = arith.muli %c0_i32, %c8_i32 : i32
    %31 = tpu.assume_multiple %30, 8 : i32
    %c0_2 = arith.constant 0 : index
    %32 = arith.index_cast %31 : i32 to index
    %c0_3 = arith.constant 0 : index
    %c0_4 = arith.constant 0 : index
    %33 = vector.load %arg2[%c0_2, %32, %c0_3, %c0_4] : memref<1x18x18x128xf32, #tpu.memory_space<vmem>>, vector<1x10x18x128xf32>
    %34 = vector.extract_strided_slice %33 {offsets = [0, 0, 0, 0], sizes = [1, 10, 16, 128], strides = [1, 1, 1, 1]} : vector<1x10x18x128xf32> to vector<1x10x16x128xf32>
    %35 = vector.extract_strided_slice %33 {offsets = [0, 0, 1, 0], sizes = [1, 10, 16, 128], strides = [1, 1, 1, 1]} : vector<1x10x18x128xf32> to vector<1x10x16x128xf32>
    %36 = vector.extract_strided_slice %33 {offsets = [0, 0, 2, 0], sizes = [1, 10, 16, 128], strides = [1, 1, 1, 1]} : vector<1x10x18x128xf32> to vector<1x10x16x128xf32>
    %cst_5 = arith.constant 0.000000e+00 : f32
    %37 = vector.broadcast %cst_5 : f32 to vector<1x8x16x128xf32>
    %38 = vector.extract_strided_slice %34 {offsets = [0, 0, 0, 0], sizes = [1, 8, 16, 128], strides = [1, 1, 1, 1]} : vector<1x10x16x128xf32> to vector<1x8x16x128xf32>
    %39 = vector.broadcast %3 : vector<1x1x1x128xf32> to vector<1x8x16x128xf32>
    %40 = arith.mulf %38, %39 : vector<1x8x16x128xf32>
    %41 = arith.addf %37, %40 : vector<1x8x16x128xf32>
    %42 = vector.extract_strided_slice %35 {offsets = [0, 0, 0, 0], sizes = [1, 8, 16, 128], strides = [1, 1, 1, 1]} : vector<1x10x16x128xf32> to vector<1x8x16x128xf32>
    %43 = vector.broadcast %6 : vector<1x1x1x128xf32> to vector<1x8x16x128xf32>
    %44 = arith.mulf %42, %43 : vector<1x8x16x128xf32>
    %45 = arith.addf %41, %44 : vector<1x8x16x128xf32>
    %46 = vector.extract_strided_slice %36 {offsets = [0, 0, 0, 0], sizes = [1, 8, 16, 128], strides = [1, 1, 1, 1]} : vector<1x10x16x128xf32> to vector<1x8x16x128xf32>
    %47 = vector.broadcast %9 : vector<1x1x1x128xf32> to vector<1x8x16x128xf32>
    %48 = arith.mulf %46, %47 : vector<1x8x16x128xf32>
    %49 = arith.addf %45, %48 : vector<1x8x16x128xf32>
    %50 = vector.extract_strided_slice %34 {offsets = [0, 1, 0, 0], sizes = [1, 8, 16, 128], strides = [1, 1, 1, 1]} : vector<1x10x16x128xf32> to vector<1x8x16x128xf32>
    %51 = vector.broadcast %12 : vector<1x1x1x128xf32> to vector<1x8x16x128xf32>
    %52 = arith.mulf %50, %51 : vector<1x8x16x128xf32>
    %53 = arith.addf %49, %52 : vector<1x8x16x128xf32>
    %54 = vector.extract_strided_slice %35 {offsets = [0, 1, 0, 0], sizes = [1, 8, 16, 128], strides = [1, 1, 1, 1]} : vector<1x10x16x128xf32> to vector<1x8x16x128xf32>
    %55 = vector.broadcast %15 : vector<1x1x1x128xf32> to vector<1x8x16x128xf32>
    %56 = arith.mulf %54, %55 : vector<1x8x16x128xf32>
    %57 = arith.addf %53, %56 : vector<1x8x16x128xf32>
    %58 = vector.extract_strided_slice %36 {offsets = [0, 1, 0, 0], sizes = [1, 8, 16, 128], strides = [1, 1, 1, 1]} : vector<1x10x16x128xf32> to vector<1x8x16x128xf32>
    %59 = vector.broadcast %18 : vector<1x1x1x128xf32> to vector<1x8x16x128xf32>
    %60 = arith.mulf %58, %59 : vector<1x8x16x128xf32>
    %61 = arith.addf %57, %60 : vector<1x8x16x128xf32>
    %62 = vector.extract_strided_slice %34 {offsets = [0, 2, 0, 0], sizes = [1, 8, 16, 128], strides = [1, 1, 1, 1]} : vector<1x10x16x128xf32> to vector<1x8x16x128xf32>
    %63 = vector.broadcast %21 : vector<1x1x1x128xf32> to vector<1x8x16x128xf32>
    %64 = arith.mulf %62, %63 : vector<1x8x16x128xf32>
    %65 = arith.addf %61, %64 : vector<1x8x16x128xf32>
    %66 = vector.extract_strided_slice %35 {offsets = [0, 2, 0, 0], sizes = [1, 8, 16, 128], strides = [1, 1, 1, 1]} : vector<1x10x16x128xf32> to vector<1x8x16x128xf32>
    %67 = vector.broadcast %24 : vector<1x1x1x128xf32> to vector<1x8x16x128xf32>
    %68 = arith.mulf %66, %67 : vector<1x8x16x128xf32>
    %69 = arith.addf %65, %68 : vector<1x8x16x128xf32>
    %70 = vector.extract_strided_slice %36 {offsets = [0, 2, 0, 0], sizes = [1, 8, 16, 128], strides = [1, 1, 1, 1]} : vector<1x10x16x128xf32> to vector<1x8x16x128xf32>
    %71 = vector.broadcast %27 : vector<1x1x1x128xf32> to vector<1x8x16x128xf32>
    %72 = arith.mulf %70, %71 : vector<1x8x16x128xf32>
    %73 = arith.addf %69, %72 : vector<1x8x16x128xf32>
    %c0_6 = arith.constant 0 : index
    %74 = arith.index_cast %31 : i32 to index
    %c0_7 = arith.constant 0 : index
    %c0_8 = arith.constant 0 : index
    %75 = vector.load %arg4[%c0_6, %74, %c0_7, %c0_8] : memref<1x16x16x128xf32, #tpu.memory_space<vmem>>, vector<1x8x16x128xf32>
    tpu.vector_store %arg4[%c0_6, %74, %c0_7, %c0_8], %73 {strides = array<i32>} : memref<1x16x16x128xf32, #tpu.memory_space<vmem>>, vector<1x8x16x128xf32>,
    %cst_9 = arith.constant dense<0.000000e+00> : vector<1x128xf32>
    %76 = vector.multi_reduction <add>, %73, %cst_9 [1, 2] : vector<1x8x16x128xf32> to vector<1x128xf32>
    %77 = arith.addf %28, %76 : vector<1x128xf32>
    %78 = arith.mulf %73, %73 : vector<1x8x16x128xf32>
    %cst_10 = arith.constant dense<0.000000e+00> : vector<1x128xf32>
    %79 = vector.multi_reduction <add>, %78, %cst_10 [1, 2] : vector<1x8x16x128xf32> to vector<1x128xf32>
    %80 = arith.addf %29, %79 : vector<1x128xf32>
    %c1_i32 = arith.constant 1 : i32
    %c8_i32_11 = arith.constant 8 : i32
    %81 = arith.muli %c1_i32, %c8_i32_11 : i32
    %82 = tpu.assume_multiple %81, 8 : i32
    %c0_12 = arith.constant 0 : index
    %83 = arith.index_cast %82 : i32 to index
    %c0_13 = arith.constant 0 : index
    %c0_14 = arith.constant 0 : index
    %84 = vector.load %arg2[%c0_12, %83, %c0_13, %c0_14] : memref<1x18x18x128xf32, #tpu.memory_space<vmem>>, vector<1x10x18x128xf32>
    %85 = vector.extract_strided_slice %84 {offsets = [0, 0, 0, 0], sizes = [1, 10, 16, 128], strides = [1, 1, 1, 1]} : vector<1x10x18x128xf32> to vector<1x10x16x128xf32>
    %86 = vector.extract_strided_slice %84 {offsets = [0, 0, 1, 0], sizes = [1, 10, 16, 128], strides = [1, 1, 1, 1]} : vector<1x10x18x128xf32> to vector<1x10x16x128xf32>
    %87 = vector.extract_strided_slice %84 {offsets = [0, 0, 2, 0], sizes = [1, 10, 16, 128], strides = [1, 1, 1, 1]} : vector<1x10x18x128xf32> to vector<1x10x16x128xf32>
    %cst_15 = arith.constant 0.000000e+00 : f32
    %88 = vector.broadcast %cst_15 : f32 to vector<1x8x16x128xf32>
    %89 = vector.extract_strided_slice %85 {offsets = [0, 0, 0, 0], sizes = [1, 8, 16, 128], strides = [1, 1, 1, 1]} : vector<1x10x16x128xf32> to vector<1x8x16x128xf32>
    %90 = vector.broadcast %3 : vector<1x1x1x128xf32> to vector<1x8x16x128xf32>
    %91 = arith.mulf %89, %90 : vector<1x8x16x128xf32>
    %92 = arith.addf %88, %91 : vector<1x8x16x128xf32>
    %93 = vector.extract_strided_slice %86 {offsets = [0, 0, 0, 0], sizes = [1, 8, 16, 128], strides = [1, 1, 1, 1]} : vector<1x10x16x128xf32> to vector<1x8x16x128xf32>
    %94 = vector.broadcast %6 : vector<1x1x1x128xf32> to vector<1x8x16x128xf32>
    %95 = arith.mulf %93, %94 : vector<1x8x16x128xf32>
    %96 = arith.addf %92, %95 : vector<1x8x16x128xf32>
    %97 = vector.extract_strided_slice %87 {offsets = [0, 0, 0, 0], sizes = [1, 8, 16, 128], strides = [1, 1, 1, 1]} : vector<1x10x16x128xf32> to vector<1x8x16x128xf32>
    %98 = vector.broadcast %9 : vector<1x1x1x128xf32> to vector<1x8x16x128xf32>
    %99 = arith.mulf %97, %98 : vector<1x8x16x128xf32>
    %100 = arith.addf %96, %99 : vector<1x8x16x128xf32>
    %101 = vector.extract_strided_slice %85 {offsets = [0, 1, 0, 0], sizes = [1, 8, 16, 128], strides = [1, 1, 1, 1]} : vector<1x10x16x128xf32> to vector<1x8x16x128xf32>
    %102 = vector.broadcast %12 : vector<1x1x1x128xf32> to vector<1x8x16x128xf32>
    %103 = arith.mulf %101, %102 : vector<1x8x16x128xf32>
    %104 = arith.addf %100, %103 : vector<1x8x16x128xf32>
    %105 = vector.extract_strided_slice %86 {offsets = [0, 1, 0, 0], sizes = [1, 8, 16, 128], strides = [1, 1, 1, 1]} : vector<1x10x16x128xf32> to vector<1x8x16x128xf32>
    %106 = vector.broadcast %15 : vector<1x1x1x128xf32> to vector<1x8x16x128xf32>
    %107 = arith.mulf %105, %106 : vector<1x8x16x128xf32>
    %108 = arith.addf %104, %107 : vector<1x8x16x128xf32>
    %109 = vector.extract_strided_slice %87 {offsets = [0, 1, 0, 0], sizes = [1, 8, 16, 128], strides = [1, 1, 1, 1]} : vector<1x10x16x128xf32> to vector<1x8x16x128xf32>
    %110 = vector.broadcast %18 : vector<1x1x1x128xf32> to vector<1x8x16x128xf32>
    %111 = arith.mulf %109, %110 : vector<1x8x16x128xf32>
    %112 = arith.addf %108, %111 : vector<1x8x16x128xf32>
    %113 = vector.extract_strided_slice %85 {offsets = [0, 2, 0, 0], sizes = [1, 8, 16, 128], strides = [1, 1, 1, 1]} : vector<1x10x16x128xf32> to vector<1x8x16x128xf32>
    %114 = vector.broadcast %21 : vector<1x1x1x128xf32> to vector<1x8x16x128xf32>
    %115 = arith.mulf %113, %114 : vector<1x8x16x128xf32>
    %116 = arith.addf %112, %115 : vector<1x8x16x128xf32>
    %117 = vector.extract_strided_slice %86 {offsets = [0, 2, 0, 0], sizes = [1, 8, 16, 128], strides = [1, 1, 1, 1]} : vector<1x10x16x128xf32> to vector<1x8x16x128xf32>
    %118 = vector.broadcast %24 : vector<1x1x1x128xf32> to vector<1x8x16x128xf32>
    %119 = arith.mulf %117, %118 : vector<1x8x16x128xf32>
    %120 = arith.addf %116, %119 : vector<1x8x16x128xf32>
    %121 = vector.extract_strided_slice %87 {offsets = [0, 2, 0, 0], sizes = [1, 8, 16, 128], strides = [1, 1, 1, 1]} : vector<1x10x16x128xf32> to vector<1x8x16x128xf32>
    %122 = vector.broadcast %27 : vector<1x1x1x128xf32> to vector<1x8x16x128xf32>
    %123 = arith.mulf %121, %122 : vector<1x8x16x128xf32>
    %124 = arith.addf %120, %123 : vector<1x8x16x128xf32>
    %c0_16 = arith.constant 0 : index
    %125 = arith.index_cast %82 : i32 to index
    %c0_17 = arith.constant 0 : index
    %c0_18 = arith.constant 0 : index
    %126 = vector.load %arg4[%c0_16, %125, %c0_17, %c0_18] : memref<1x16x16x128xf32, #tpu.memory_space<vmem>>, vector<1x8x16x128xf32>
    tpu.vector_store %arg4[%c0_16, %125, %c0_17, %c0_18], %124 {strides = array<i32>} : memref<1x16x16x128xf32, #tpu.memory_space<vmem>>, vector<1x8x16x128xf32>,
    %cst_19 = arith.constant dense<0.000000e+00> : vector<1x128xf32>
    %127 = vector.multi_reduction <add>, %124, %cst_19 [1, 2] : vector<1x8x16x128xf32> to vector<1x128xf32>
    %128 = arith.addf %77, %127 : vector<1x128xf32>
    %129 = arith.mulf %124, %124 : vector<1x8x16x128xf32>
    %cst_20 = arith.constant dense<0.000000e+00> : vector<1x128xf32>
    %130 = vector.multi_reduction <add>, %129, %cst_20 [1, 2] : vector<1x8x16x128xf32> to vector<1x128xf32>
    %131 = arith.addf %80, %130 : vector<1x128xf32>
    %c2_i32 = arith.constant 2 : i32
    %132 = vector.shape_cast %128 : vector<1x128xf32> to vector<1x1x128xf32>
    %c0_21 = arith.constant 0 : index
    %c0_22 = arith.constant 0 : index
    %c0_23 = arith.constant 0 : index
    %133 = vector.load %arg5[%c0_21, %c0_22, %c0_23] : memref<1x1x128xf32, #tpu.memory_space<vmem>>, vector<1x1x128xf32>
    tpu.vector_store %arg5[%c0_21, %c0_22, %c0_23], %132 {strides = array<i32>} : memref<1x1x128xf32, #tpu.memory_space<vmem>>, vector<1x1x128xf32>,
    %134 = vector.shape_cast %131 : vector<1x128xf32> to vector<1x1x128xf32>
    %c0_24 = arith.constant 0 : index
    %c0_25 = arith.constant 0 : index
    %c0_26 = arith.constant 0 : index
    %135 = vector.load %arg6[%c0_24, %c0_25, %c0_26] : memref<1x1x128xf32, #tpu.memory_space<vmem>>, vector<1x1x128xf32>
    tpu.vector_store %arg6[%c0_24, %c0_25, %c0_26], %134 {strides = array<i32>} : memref<1x1x128xf32, #tpu.memory_space<vmem>>, vector<1x1x128xf32>,
    return
  }
  func.func @transform_0(%arg0: i32, %arg1: i32) -> (i32, i32, i32, i32) {
    %c0_i32 = arith.constant 0 : i32
    %c0_i32_0 = arith.constant 0 : i32
    %c0_i32_1 = arith.constant 0 : i32
    return %arg1, %c0_i32, %c0_i32_0, %arg0 : i32, i32, i32, i32
  }
  func.func @transform_1(%arg0: i32, %arg1: i32) -> (i32, i32) {
    %c0_i32 = arith.constant 0 : i32
    %c0_i32_0 = arith.constant 0 : i32
    return %c0_i32, %arg0 : i32, i32
  }
  func.func @transform_2(%arg0: i32, %arg1: i32) -> (i32, i32, i32, i32) {
    %c0_i32 = arith.constant 0 : i32
    %c0_i32_0 = arith.constant 0 : i32
    %c0_i32_1 = arith.constant 0 : i32
    return %arg1, %c0_i32, %c0_i32_0, %arg0 : i32, i32, i32, i32
  }
  func.func @transform_3(%arg0: i32, %arg1: i32) -> (i32, i32, i32) {
    %c0_i32 = arith.constant 0 : i32
    %c0_i32_0 = arith.constant 0 : i32
    return %arg1, %c0_i32, %arg0 : i32, i32, i32
  }
  func.func @transform_4(%arg0: i32, %arg1: i32) -> (i32, i32, i32) {
    %c0_i32 = arith.constant 0 : i32
    %c0_i32_0 = arith.constant 0 : i32
    return %arg1, %c0_i32, %arg0 : i32, i32, i32
  }
}

</mosaic_0001>

<llo_original>
// kernel: tpu_custom_call.1
$region0: #{tpu_custom_call.1}
  #allocation0 [shape = 'u32[]', space=smem, size = 0x4, offset = 0x4, fixed_abs, tag = 'smem constant byte address 0x4 - core index']
  #allocation1 [shape = 'u32[144,128]{1,0:T(1,128)}', space=vmem, size = 0x12000, scoped, tag = 'internal scratch']
  %s0 = inlined_call_operand.vmem [shape: f32[2,18,18,128], index: 0, kind: input, shape index: {}]
  %s1 = inlined_call_operand.vmem [shape: f32[9,128], index: 1, kind: input, shape index: {}]
  %s2 = inlined_call_operand.hbm [shape: f32[2,16,16,128], index: 2, kind: output, shape index: {0}]
  %s3 = inlined_call_operand.hbm [shape: f32[2,1,128], index: 3, kind: output, shape index: {1}]
  %s4 = inlined_call_operand.hbm [shape: f32[2,1,128], index: 4, kind: output, shape index: {2}]
  %5 = xla_tuple %s2, %s3, %s4
  %s6 = sld [smem:[#allocation0]]
  $region57: #{tpu_custom_call.1} parent=0
    _
  %s8 = ssub.s32 1, %s6
  %s9 = scalar_select 0, %s8, %s6
  $region1: #{tpu_custom_call.1} parent=0
    #allocation2 [shape = 'u8[262144]{0}', space=vmem, size = 0x40000, scoped, tag = 'output window, operand 0']
    #allocation3 [shape = 's32[2]{0}', space=sflag, size = 0x8, scoped, tag = 'scoped memory for tpu_custom_call.1']
    #allocation4 [shape = 'u8[1024]{0}', space=vmem, size = 0x400, scoped, tag = 'output window, operand 1']
    #allocation5 [shape = 's32[2]{0}', space=sflag, size = 0x8, scoped, tag = 'scoped memory for tpu_custom_call.1']
    #allocation6 [shape = 'u8[1024]{0}', space=vmem, size = 0x400, scoped, tag = 'output window, operand 2']
    %10 = vsyncpa [#allocation3], 0
    %s11 = scalar_lea.sflag [#allocation3], 1
    %12 = vsyncpa %s11, 0
    %13 = vsyncpa [#allocation5], 0
    %s14 = scalar_lea.sflag [#allocation5], 1
    %15 = vsyncpa %s14, 0
    loop: start=0, step=1, limit=4
    $region2: #{tpu_custom_call.1} parent=1 // loop_pre_header
      _
    $region3: #{tpu_custom_call.1} parent=1 // loop_header
      %s17 = sphi 0, %s21
      %p18 = scmp.ge.s32.totalorder %s17, 4
      %s24 = sphi 0, %s36
      %s25 = sphi 0, %s32
      %s26 = sphi 0, %s24
      %s27 = sphi 0, %s25
      %s28 = sphi 0, %s26
      %s29 = sphi 0, %s27
      %s41 = sphi 0, %s43
      %s44 = sphi 0, %s41
      %s45 = sphi 0, %s44
      %s61 = sphi 0, %s45
      %s67 = sphi 0, %s69
      %s70 = sphi 0, %s67
      %s71 = sphi 0, %s70
      %s87 = sphi 0, %s71
      %s95 = sphi 0, %s97
      %s98 = sphi 0, %s95
      %s99 = sphi 0, %s98
      %s115 = sphi 0, %s99
      %s123 = sphi 0, %s125
      %s126 = sphi 0, %s123
      %s127 = sphi 0, %s126
      %s143 = sphi 0, %s127
      %s151 = sphi 0, %s153
      %s154 = sphi 0, %s151
      %s155 = sphi 0, %s154
      %s171 = sphi 0, %s155
    $region4: #{tpu_custom_call.1} parent=1 // loop_header_branch
      %20 = sbr.rel (%p18) target = $region8
    $region5: #{tpu_custom_call.1} parent=1 // loop_body
      %s22 = ssub.s32 %s17, 1
      %s23 = ssub.s32 %s17, 2
      %s30 = sadd.s32 1, %s25
      %p31 = scmp.ge.s32.totalorder %s30, 2
      %s32 = scalar_select %p31, 0, %s30
      %s33 = sadd.s32 1, %s24
      %s34 = scalar_select %p31, %s33, %s24
      %p35 = scmp.ge.s32.totalorder %s34, 1
      %s36 = scalar_select %p35, 0, %s34
      %s37 = ssub.s32 %s25, %s32
      %s38 = ssub.s32 %s24, %s36
      %s39 = sor.u32 %s37, %s38
      %p40 = scmp.eq.s32.totalorder %s39, 0
      %s42 = sadd.s32 %s41, 1
      %s43 = scalar_select %p40, %s41, %s42
      %p46 = pneg %p40
      %p47 = scmp.eq.s32.totalorder %s17, 1
      %p48 = por %p46, %p47
      %p49 = scmp.ne.s32.totalorder %s41, %s44
      %p50 = scmp.eq.s32.totalorder %s17, 0
      %p51 = por %p49, %p50
      %p52 = scmp.ne.s32.totalorder %s41, %s44
      %p53 = scmp.eq.s32.totalorder %s22, 1
      %p54 = por %p52, %p53
      %p55 = scmp.ne.s32.totalorder %s44, %s45
      %p56 = scmp.eq.s32.totalorder %s22, 0
      %p57 = por %p55, %p56
      %p58 = scmp.ne.s32.totalorder %s44, %s45
      %p59 = scmp.eq.s32.totalorder %s23, 1
      %p60 = por %p58, %p59
      %p62 = scmp.ne.s32.totalorder %s45, %s61
      %p63 = scmp.eq.s32.totalorder %s23, 0
      %p64 = por %p62, %p63
      %s65 = ssub.s32 %s24, %s36
      %p66 = scmp.eq.s32.totalorder %s65, 0
      %s68 = sadd.s32 %s67, 1
      %s69 = scalar_select %p66, %s67, %s68
      %p72 = pneg %p66
      %p73 = scmp.eq.s32.totalorder %s17, 1
      %p74 = por %p72, %p73
      %p75 = scmp.ne.s32.totalorder %s67, %s70
      %p76 = scmp.eq.s32.totalorder %s17, 0
      %p77 = por %p75, %p76
      %p78 = scmp.ne.s32.totalorder %s67, %s70
      %p79 = scmp.eq.s32.totalorder %s22, 1
      %p80 = por %p78, %p79
      %p81 = scmp.ne.s32.totalorder %s70, %s71
      %p82 = scmp.eq.s32.totalorder %s22, 0
      %p83 = por %p81, %p82
      %p84 = scmp.ne.s32.totalorder %s70, %s71
      %p85 = scmp.eq.s32.totalorder %s23, 1
      %p86 = por %p84, %p85
      %p88 = scmp.ne.s32.totalorder %s71, %s87
      %p89 = scmp.eq.s32.totalorder %s23, 0
      %p90 = por %p88, %p89
      %s91 = ssub.s32 %s25, %s32
      %s92 = ssub.s32 %s24, %s36
      %s93 = sor.u32 %s91, %s92
      %p94 = scmp.eq.s32.totalorder %s93, 0
      %s96 = sadd.s32 %s95, 1
      %s97 = scalar_select %p94, %s95, %s96
      %p100 = pneg %p94
      %p101 = scmp.eq.s32.totalorder %s17, 1
      %p102 = por %p100, %p101
      %p103 = scmp.ne.s32.totalorder %s95, %s98
      %p104 = scmp.eq.s32.totalorder %s17, 0
      %p105 = por %p103, %p104
      %p106 = scmp.ne.s32.totalorder %s95, %s98
      %p107 = scmp.eq.s32.totalorder %s22, 1
      %p108 = por %p106, %p107
      %p109 = scmp.ne.s32.totalorder %s98, %s99
      %p110 = scmp.eq.s32.totalorder %s22, 0
      %p111 = por %p109, %p110
      %p112 = scmp.ne.s32.totalorder %s98, %s99
      %p113 = scmp.eq.s32.totalorder %s23, 1
      %p114 = por %p112, %p113
      %p116 = scmp.ne.s32.totalorder %s99, %s115
      %p117 = scmp.eq.s32.totalorder %s23, 0
      %p118 = por %p116, %p117
      %s119 = ssub.s32 %s25, %s32
      %s120 = ssub.s32 %s24, %s36
      %s121 = sor.u32 %s119, %s120
      %p122 = scmp.eq.s32.totalorder %s121, 0
      %s124 = sadd.s32 %s123, 1
      %s125 = scalar_select %p122, %s123, %s124
      %p128 = pneg %p122
      %p129 = scmp.eq.s32.totalorder %s17, 1
      %p130 = por %p128, %p129
      %p131 = scmp.ne.s32.totalorder %s123, %s126
      %p132 = scmp.eq.s32.totalorder %s17, 0
      %p133 = por %p131, %p132
      %p134 = scmp.ne.s32.totalorder %s123, %s126
      %p135 = scmp.eq.s32.totalorder %s22, 1
      %p136 = por %p134, %p135
      %p137 = scmp.ne.s32.totalorder %s126, %s127
      %p138 = scmp.eq.s32.totalorder %s22, 0
      %p139 = por %p137, %p138
      %p140 = scmp.ne.s32.totalorder %s126, %s127
      %p141 = scmp.eq.s32.totalorder %s23, 1
      %p142 = por %p140, %p141
      %p144 = scmp.ne.s32.totalorder %s127, %s143
      %p145 = scmp.eq.s32.totalorder %s23, 0
      %p146 = por %p144, %p145
      %s147 = ssub.s32 %s25, %s32
      %s148 = ssub.s32 %s24, %s36
      %s149 = sor.u32 %s147, %s148
      %p150 = scmp.eq.s32.totalorder %s149, 0
      %s152 = sadd.s32 %s151, 1
      %s153 = scalar_select %p150, %s151, %s152
      %p156 = pneg %p150
      %p157 = scmp.eq.s32.totalorder %s17, 1
      %p158 = por %p156, %p157
      %p159 = scmp.ne.s32.totalorder %s151, %s154
      %p160 = scmp.eq.s32.totalorder %s17, 0
      %p161 = por %p159, %p160
      %p162 = scmp.ne.s32.totalorder %s151, %s154
      %p163 = scmp.eq.s32.totalorder %s22, 1
      %p164 = por %p162, %p163
      %p165 = scmp.ne.s32.totalorder %s154, %s155
      %p166 = scmp.eq.s32.totalorder %s22, 0
      %p167 = por %p165, %p166
      %p168 = scmp.ne.s32.totalorder %s154, %s155
      %p169 = scmp.eq.s32.totalorder %s23, 1
      %p170 = por %p168, %p169
      %p172 = scmp.ne.s32.totalorder %s155, %s171
      %p173 = scmp.eq.s32.totalorder %s23, 0
      %p174 = por %p172, %p173
      %p175 = scmp.le.s32.totalorder 1, %s17
      %p176 = scmp.lt.s32.totalorder %s17, 3
      %p177 = pnand %p175, %p176
      %p178 = pneg %p177
      // Predicated region
      $region9: #{tpu_custom_call.1} parent=5 // pred_check
        _
      $region10: #{tpu_custom_call.1} parent=5 // pred_check_branch
        %180 = sbr.rel (%p177) target = $region12
      $region11: #{tpu_custom_call.1} parent=5 // pred_region
        %s181 = ssub.s32 %s17, 1
        // Predicated region
        $region13: #{tpu_custom_call.1} parent=11 // pred_check
          %p182 = pneg %p83
        $region14: #{tpu_custom_call.1} parent=11 // pred_check_branch
          %184 = sbr.rel (%p182) target = $region16
        $region15: #{tpu_custom_call.1} parent=11 // pred_region
          %p185 = scmp.lt.s32.totalorder %s26, 0
          %s186 = scalar_select %p185, %s26, 0
          %s187 = smul.addr %s186, 8
          %s188 = scalar_lea.vmem %s1, %s187
        $region16: #{tpu_custom_call.1} parent=11 // pred_fallthru
          _
      $region12: #{tpu_custom_call.1} parent=5 // pred_fallthru
        _
      %p189 = scmp.lt.s32.totalorder %s17, 2
      // Predicated region
      $region17: #{tpu_custom_call.1} parent=5 // pred_check
        %p190 = pneg %p189
      $region18: #{tpu_custom_call.1} parent=5 // pred_check_branch
        %192 = sbr.rel (%p190) target = $region20
      $region19: #{tpu_custom_call.1} parent=5 // pred_region
        // Predicated region
        $region21: #{tpu_custom_call.1} parent=19 // pred_check
          %p193 = pneg %p51
        $region22: #{tpu_custom_call.1} parent=19 // pred_check_branch
          %195 = sbr.rel (%p193) target = $region24
        $region23: #{tpu_custom_call.1} parent=19 // pred_region
          %p196 = scmp.lt.s32.totalorder %s25, 1
          %s197 = scalar_select %p196, %s25, 1
          %p198 = scmp.lt.s32.totalorder %s24, 0
          %s199 = scalar_select %p198, %s24, 0
          %s200 = smul.addr %s197, 54
          %s201 = sadd.s32 %s199, %s200
          %s202 = smul.addr %s201, 8
          %s203 = scalar_lea.vmem %s0, %s202
        $region24: #{tpu_custom_call.1} parent=19 // pred_fallthru
          _
      $region20: #{tpu_custom_call.1} parent=5 // pred_fallthru
        _
      %p204 = scmp.le.s32.totalorder 1, %s17
      %p205 = scmp.lt.s32.totalorder %s17, 3
      %p206 = pnand %p204, %p205
      %p207 = pneg %p206
      // Predicated region
      $region25: #{tpu_custom_call.1} parent=5 // pred_check
        _
      $region26: #{tpu_custom_call.1} parent=5 // pred_check_branch
        %209 = sbr.rel (%p206) target = $region28
      $region27: #{tpu_custom_call.1} parent=5 // pred_region
        %s210 = ssub.s32 %s17, 1
        %p211 = scmp.lt.s32.totalorder %s27, 1
        %s212 = scalar_select %p211, %s27, 1
        %p213 = scmp.lt.s32.totalorder %s26, 0
        %s214 = scalar_select %p213, %s26, 0
        %s215 = smul.addr %s212, 54
        %s216 = sadd.s32 %s214, %s215
        %s217 = smul.addr %s216, 8
        %s218 = scalar_lea.vmem %s0, %s217
        %p219 = pneg %p57
        %p220 = pneg %p54
        %p221 = scmp.lt.s32.totalorder %s26, 0
        %s222 = scalar_select %p221, %s26, 0
        %s223 = smul.addr %s222, 8
        %s224 = scalar_lea.vmem %s1, %s223
        %p225 = pneg %p83
        %p226 = pneg %p80
        %p227 = pneg %p111
        %p228 = pneg %p108
        %s229 = sand.u32 %s98, 1
        %s230 = scalar_lea.sflag [#allocation3], %s229
        %s231 = sand.u32 %s98, 1
        %s232 = smul.addr %s231, 256
        %s233 = scalar_lea.vmem [#allocation2], %s232
        %p234 = pneg %p139
        %p235 = pneg %p136
        %s236 = sand.u32 %s22, 1
        %s237 = scalar_lea.sflag [#allocation5], %s236
        %s238 = sand.u32 %s126, 1
        %s239 = scalar_lea.vmem [#allocation4], %s238
        %p240 = pneg %p167
        %p241 = pneg %p164
        %s242 = sand.u32 %s22, 1
        %s243 = scalar_lea.sflag [#allocation5], %s242
        %s244 = sand.u32 %s154, 1
        %s245 = scalar_lea.vmem [#allocation6], %s244
        %p246 = scmp.lt.s32.totalorder %s27, 1
        %s247 = scalar_select %p246, %s27, 1
        %p248 = scmp.lt.s32.totalorder %s26, 0
        %s249 = scalar_select %p248, %s26, 0
        %s250 = smul.addr %s247, 54
        %s251 = sadd.s32 %s249, %s250
        %s252 = smul.addr %s251, 8
        %s253 = scalar_lea.vmem %s0, %s252
        %p254 = scmp.lt.s32.totalorder %s26, 0
        %s255 = scalar_select %p254, %s26, 0
        %s256 = smul.addr %s255, 8
        %s257 = scalar_lea.vmem %s1, %s256
        %v258 = vld [vmem:[%s257] sm:$0xff]
        %v259 = vld [vmem:[%s257 + $0x8] sm:$0x1]
        %s260 = smul.u32 0, 24
        %s261 = scalar_lea.vmem %s253, %s260
        %v262 = vld [vmem:[%s261] sm:$0xff]
        %v263 = vld [vmem:[%s261 + $0x8] sm:$0xff]
        %v264 = vld [vmem:[%s261 + $0x10] sm:$0x3]
        %v265 = vld [vmem:[%s261 + $0x18] sm:$0xff]
        %v266 = vld [vmem:[%s261 + $0x20] sm:$0xff]
        %v267 = vld [vmem:[%s261 + $0x28] sm:$0x3]
        %v268 = vld [vmem:[%s261 + $0x30] sm:$0xff]
        %v269 = vld [vmem:[%s261 + $0x38] sm:$0xff]
        %v270 = vld [vmem:[%s261 + $0x40] sm:$0x3]
        %v271 = vld [vmem:[%s261 + $0x48] sm:$0xff]
        %v272 = vld [vmem:[%s261 + $0x50] sm:$0xff]
        %v273 = vld [vmem:[%s261 + $0x58] sm:$0x3]
        %v274 = vld [vmem:[%s261 + $0x60] sm:$0xff]
        %v275 = vld [vmem:[%s261 + $0x68] sm:$0xff]
        %v276 = vld [vmem:[%s261 + $0x70] sm:$0x3]
        %v277 = vld [vmem:[%s261 + $0x78] sm:$0xff]
        %v278 = vld [vmem:[%s261 + $0x80] sm:$0xff]
        %v279 = vld [vmem:[%s261 + $0x88] sm:$0x3]
        %v280 = vld [vmem:[%s261 + $0x90] sm:$0xff]
        %v281 = vld [vmem:[%s261 + $0x98] sm:$0xff]
        %v282 = vld [vmem:[%s261 + $0xa0] sm:$0x3]
        %v283 = vld [vmem:[%s261 + $0xa8] sm:$0xff]
        %v284 = vld [vmem:[%s261 + $0xb0] sm:$0xff]
        %v285 = vld [vmem:[%s261 + $0xb8] sm:$0x3]
        %v286 = vld [vmem:[%s261 + $0xc0] sm:$0xff]
        %v287 = vld [vmem:[%s261 + $0xc8] sm:$0xff]
        %v288 = vld [vmem:[%s261 + $0xd0] sm:$0x3]
        %v289 = vld [vmem:[%s261 + $0xd8] sm:$0xff]
        %v290 = vld [vmem:[%s261 + $0xe0] sm:$0xff]
        %v291 = vld [vmem:[%s261 + $0xe8] sm:$0x3]
        %v292 = vlaneseq
        %v293 = vshrl.u32 %v292, 7
        %v294 = vsub.s32 0, %v293
        %v295 = vrot.slane %v258, %v294
        %v296 = vmul.f32 %v262, %v295
        %v297 = vmul.f32 %v263, %v295
        %v298 = vmul.f32 %v265, %v295
        %v299 = vmul.f32 %v266, %v295
        %v300 = vmul.f32 %v268, %v295
        %v301 = vmul.f32 %v269, %v295
        %v302 = vmul.f32 %v271, %v295
        %v303 = vmul.f32 %v272, %v295
        %v304 = vmul.f32 %v274, %v295
        %v305 = vmul.f32 %v275, %v295
        %v306 = vmul.f32 %v277, %v295
        %v307 = vmul.f32 %v278, %v295
        %v308 = vmul.f32 %v280, %v295
        %v309 = vmul.f32 %v281, %v295
        %v310 = vmul.f32 %v283, %v295
        %v311 = vmul.f32 %v284, %v295
        %v312 = vadd.f32 %v296, 0.0
        %v313 = vadd.f32 %v297, 0.0
        %v314 = vadd.f32 %v298, 0.0
        %v315 = vadd.f32 %v299, 0.0
        %v316 = vadd.f32 %v300, 0.0
        %v317 = vadd.f32 %v301, 0.0
        %v318 = vadd.f32 %v302, 0.0
        %v319 = vadd.f32 %v303, 0.0
        %v320 = vadd.f32 %v304, 0.0
        %v321 = vadd.f32 %v305, 0.0
        %v322 = vadd.f32 %v306, 0.0
        %v323 = vadd.f32 %v307, 0.0
        %v324 = vadd.f32 %v308, 0.0
        %v325 = vadd.f32 %v309, 0.0
        %v326 = vadd.f32 %v310, 0.0
        %v327 = vadd.f32 %v311, 0.0
        %v328 = vlaneseq
        %v329 = vshrl.u32 %v328, 7
        %v330 = vsub.s32 1, %v329
        %v331 = vrot.slane %v258, %v330
        %v332 = vmul.f32 %v262, %v331
        %v333 = vmul.f32 %v263, %v331
        %v334 = vmul.f32 %v264, %v331
        %v335 = vmul.f32 %v265, %v331
        %v336 = vmul.f32 %v266, %v331
        %v337 = vmul.f32 %v267, %v331
        %v338 = vmul.f32 %v268, %v331
        %v339 = vmul.f32 %v269, %v331
        %v340 = vmul.f32 %v270, %v331
        %v341 = vmul.f32 %v271, %v331
        %v342 = vmul.f32 %v272, %v331
        %v343 = vmul.f32 %v273, %v331
        %v344 = vmul.f32 %v274, %v331
        %v345 = vmul.f32 %v275, %v331
        %v346 = vmul.f32 %v276, %v331
        %v347 = vmul.f32 %v277, %v331
        %v348 = vmul.f32 %v278, %v331
        %v349 = vmul.f32 %v279, %v331
        %v350 = vmul.f32 %v280, %v331
        %v351 = vmul.f32 %v281, %v331
        %v352 = vmul.f32 %v282, %v331
        %v353 = vmul.f32 %v283, %v331
        %v354 = vmul.f32 %v284, %v331
        %v355 = vmul.f32 %v285, %v331
        %vm380 = vcmask 1046528
        %v381 = vrot.slane %v332, 1
        %v382 = vrot.slane %v333, 1
        %v383 = vsel %vm380, %v381, %v382
        %v384 = vrot.slane %v334, 1
        %v385 = vsel %vm380, %v382, %v384
        %v386 = vrot.slane %v335, 1
        %v387 = vrot.slane %v336, 1
        %v388 = vsel %vm380, %v386, %v387
        %v389 = vrot.slane %v337, 1
        %v390 = vsel %vm380, %v387, %v389
        %v391 = vrot.slane %v338, 1
        %v392 = vrot.slane %v339, 1
        %v393 = vsel %vm380, %v391, %v392
        %v394 = vrot.slane %v340, 1
        %v395 = vsel %vm380, %v392, %v394
        %v396 = vrot.slane %v341, 1
        %v397 = vrot.slane %v342, 1
        %v398 = vsel %vm380, %v396, %v397
        %v399 = vrot.slane %v343, 1
        %v400 = vsel %vm380, %v397, %v399
        %v401 = vrot.slane %v344, 1
        %v402 = vrot.slane %v345, 1
        %v403 = vsel %vm380, %v401, %v402
        %v404 = vrot.slane %v346, 1
        %v405 = vsel %vm380, %v402, %v404
        %v406 = vrot.slane %v347, 1
        %v407 = vrot.slane %v348, 1
        %v408 = vsel %vm380, %v406, %v407
        %v409 = vrot.slane %v349, 1
        %v410 = vsel %vm380, %v407, %v409
        %v411 = vrot.slane %v350, 1
        %v412 = vrot.slane %v351, 1
        %v413 = vsel %vm380, %v411, %v412
        %v414 = vrot.slane %v352, 1
        %v415 = vsel %vm380, %v412, %v414
        %v416 = vrot.slane %v353, 1
        %v417 = vrot.slane %v354, 1
        %v418 = vsel %vm380, %v416, %v417
        %v419 = vrot.slane %v355, 1
        %v420 = vsel %vm380, %v417, %v419
        %v437 = vadd.f32 %v312, %v383
        %v438 = vadd.f32 %v313, %v385
        %v439 = vadd.f32 %v314, %v388
        %v440 = vadd.f32 %v315, %v390
        %v441 = vadd.f32 %v316, %v393
        %v442 = vadd.f32 %v317, %v395
        %v443 = vadd.f32 %v318, %v398
        %v444 = vadd.f32 %v319, %v400
        %v445 = vadd.f32 %v320, %v403
        %v446 = vadd.f32 %v321, %v405
        %v447 = vadd.f32 %v322, %v408
        %v448 = vadd.f32 %v323, %v410
        %v449 = vadd.f32 %v324, %v413
        %v450 = vadd.f32 %v325, %v415
        %v451 = vadd.f32 %v326, %v418
        %v452 = vadd.f32 %v327, %v420
        %v453 = vlaneseq
        %v454 = vshrl.u32 %v453, 7
        %v455 = vsub.s32 2, %v454
        %v456 = vrot.slane %v258, %v455
        %v457 = vmul.f32 %v262, %v456
        %v458 = vmul.f32 %v263, %v456
        %v459 = vmul.f32 %v264, %v456
        %v460 = vmul.f32 %v265, %v456
        %v461 = vmul.f32 %v266, %v456
        %v462 = vmul.f32 %v267, %v456
        %v463 = vmul.f32 %v268, %v456
        %v464 = vmul.f32 %v269, %v456
        %v465 = vmul.f32 %v270, %v456
        %v466 = vmul.f32 %v271, %v456
        %v467 = vmul.f32 %v272, %v456
        %v468 = vmul.f32 %v273, %v456
        %v469 = vmul.f32 %v274, %v456
        %v470 = vmul.f32 %v275, %v456
        %v471 = vmul.f32 %v276, %v456
        %v472 = vmul.f32 %v277, %v456
        %v473 = vmul.f32 %v278, %v456
        %v474 = vmul.f32 %v279, %v456
        %v475 = vmul.f32 %v280, %v456
        %v476 = vmul.f32 %v281, %v456
        %v477 = vmul.f32 %v282, %v456
        %v478 = vmul.f32 %v283, %v456
        %v479 = vmul.f32 %v284, %v456
        %v480 = vmul.f32 %v285, %v456
        %vm505 = vcmask 1045504
        %v506 = vrot.slane %v457, 2
        %v507 = vrot.slane %v458, 2
        %v508 = vsel %vm505, %v506, %v507
        %v509 = vrot.slane %v459, 2
        %v510 = vsel %vm505, %v507, %v509
        %v511 = vrot.slane %v460, 2
        %v512 = vrot.slane %v461, 2
        %v513 = vsel %vm505, %v511, %v512
        %v514 = vrot.slane %v462, 2
        %v515 = vsel %vm505, %v512, %v514
        %v516 = vrot.slane %v463, 2
        %v517 = vrot.slane %v464, 2
        %v518 = vsel %vm505, %v516, %v517
        %v519 = vrot.slane %v465, 2
        %v520 = vsel %vm505, %v517, %v519
        %v521 = vrot.slane %v466, 2
        %v522 = vrot.slane %v467, 2
        %v523 = vsel %vm505, %v521, %v522
        %v524 = vrot.slane %v468, 2
        %v525 = vsel %vm505, %v522, %v524
        %v526 = vrot.slane %v469, 2
        %v527 = vrot.slane %v470, 2
        %v528 = vsel %vm505, %v526, %v527
        %v529 = vrot.slane %v471, 2
        %v530 = vsel %vm505, %v527, %v529
        %v531 = vrot.slane %v472, 2
        %v532 = vrot.slane %v473, 2
        %v533 = vsel %vm505, %v531, %v532
        %v534 = vrot.slane %v474, 2
        %v535 = vsel %vm505, %v532, %v534
        %v536 = vrot.slane %v475, 2
        %v537 = vrot.slane %v476, 2
        %v538 = vsel %vm505, %v536, %v537
        %v539 = vrot.slane %v477, 2
        %v540 = vsel %vm505, %v537, %v539
        %v541 = vrot.slane %v478, 2
        %v542 = vrot.slane %v479, 2
        %v543 = vsel %vm505, %v541, %v542
        %v544 = vrot.slane %v480, 2
        %v545 = vsel %vm505, %v542, %v544
        %v562 = vadd.f32 %v437, %v508
        %v563 = vadd.f32 %v438, %v510
        %v564 = vadd.f32 %v439, %v513
        %v565 = vadd.f32 %v440, %v515
        %v566 = vadd.f32 %v441, %v518
        %v567 = vadd.f32 %v442, %v520
        %v568 = vadd.f32 %v443, %v523
        %v569 = vadd.f32 %v444, %v525
        %v570 = vadd.f32 %v445, %v528
        %v571 = vadd.f32 %v446, %v530
        %v572 = vadd.f32 %v447, %v533
        %v573 = vadd.f32 %v448, %v535
        %v574 = vadd.f32 %v449, %v538
        %v575 = vadd.f32 %v450, %v540
        %v576 = vadd.f32 %v451, %v543
        %v577 = vadd.f32 %v452, %v545
        %v578 = vlaneseq
        %v579 = vshrl.u32 %v578, 7
        %v580 = vsub.s32 3, %v579
        %v581 = vrot.slane %v258, %v580
        %v582 = vmul.f32 %v265, %v581
        %v583 = vmul.f32 %v266, %v581
        %v584 = vmul.f32 %v268, %v581
        %v585 = vmul.f32 %v269, %v581
        %v586 = vmul.f32 %v271, %v581
        %v587 = vmul.f32 %v272, %v581
        %v588 = vmul.f32 %v274, %v581
        %v589 = vmul.f32 %v275, %v581
        %v590 = vmul.f32 %v277, %v581
        %v591 = vmul.f32 %v278, %v581
        %v592 = vmul.f32 %v280, %v581
        %v593 = vmul.f32 %v281, %v581
        %v594 = vmul.f32 %v283, %v581
        %v595 = vmul.f32 %v284, %v581
        %v596 = vmul.f32 %v286, %v581
        %v597 = vmul.f32 %v287, %v581
        %v598 = vadd.f32 %v562, %v582
        %v599 = vadd.f32 %v563, %v583
        %v600 = vadd.f32 %v564, %v584
        %v601 = vadd.f32 %v565, %v585
        %v602 = vadd.f32 %v566, %v586
        %v603 = vadd.f32 %v567, %v587
        %v604 = vadd.f32 %v568, %v588
        %v605 = vadd.f32 %v569, %v589
        %v606 = vadd.f32 %v570, %v590
        %v607 = vadd.f32 %v571, %v591
        %v608 = vadd.f32 %v572, %v592
        %v609 = vadd.f32 %v573, %v593
        %v610 = vadd.f32 %v574, %v594
        %v611 = vadd.f32 %v575, %v595
        %v612 = vadd.f32 %v576, %v596
        %v613 = vadd.f32 %v577, %v597
        %v614 = vlaneseq
        %v615 = vshrl.u32 %v614, 7
        %v616 = vsub.s32 4, %v615
        %v617 = vrot.slane %v258, %v616
        %v618 = vmul.f32 %v265, %v617
        %v619 = vmul.f32 %v266, %v617
        %v620 = vmul.f32 %v267, %v617
        %v621 = vmul.f32 %v268, %v617
        %v622 = vmul.f32 %v269, %v617
        %v623 = vmul.f32 %v270, %v617
        %v624 = vmul.f32 %v271, %v617
        %v625 = vmul.f32 %v272, %v617
        %v626 = vmul.f32 %v273, %v617
        %v627 = vmul.f32 %v274, %v617
        %v628 = vmul.f32 %v275, %v617
        %v629 = vmul.f32 %v276, %v617
        %v630 = vmul.f32 %v277, %v617
        %v631 = vmul.f32 %v278, %v617
        %v632 = vmul.f32 %v279, %v617
        %v633 = vmul.f32 %v280, %v617
        %v634 = vmul.f32 %v281, %v617
        %v635 = vmul.f32 %v282, %v617
        %v636 = vmul.f32 %v283, %v617
        %v637 = vmul.f32 %v284, %v617
        %v638 = vmul.f32 %v285, %v617
        %v639 = vmul.f32 %v286, %v617
        %v640 = vmul.f32 %v287, %v617
        %v641 = vmul.f32 %v288, %v617
        %v666 = vrot.slane %v618, 1
        %v667 = vrot.slane %v619, 1
        %v668 = vsel %vm380, %v666, %v667
        %v669 = vrot.slane %v620, 1
        %v670 = vsel %vm380, %v667, %v669
        %v671 = vrot.slane %v621, 1
        %v672 = vrot.slane %v622, 1
        %v673 = vsel %vm380, %v671, %v672
        %v674 = vrot.slane %v623, 1
        %v675 = vsel %vm380, %v672, %v674
        %v676 = vrot.slane %v624, 1
        %v677 = vrot.slane %v625, 1
        %v678 = vsel %vm380, %v676, %v677
        %v679 = vrot.slane %v626, 1
        %v680 = vsel %vm380, %v677, %v679
        %v681 = vrot.slane %v627, 1
        %v682 = vrot.slane %v628, 1
        %v683 = vsel %vm380, %v681, %v682
        %v684 = vrot.slane %v629, 1
        %v685 = vsel %vm380, %v682, %v684
        %v686 = vrot.slane %v630, 1
        %v687 = vrot.slane %v631, 1
        %v688 = vsel %vm380, %v686, %v687
        %v689 = vrot.slane %v632, 1
        %v690 = vsel %vm380, %v687, %v689
        %v691 = vrot.slane %v633, 1
        %v692 = vrot.slane %v634, 1
        %v693 = vsel %vm380, %v691, %v692
        %v694 = vrot.slane %v635, 1
        %v695 = vsel %vm380, %v692, %v694
        %v696 = vrot.slane %v636, 1
        %v697 = vrot.slane %v637, 1
        %v698 = vsel %vm380, %v696, %v697
        %v699 = vrot.slane %v638, 1
        %v700 = vsel %vm380, %v697, %v699
        %v701 = vrot.slane %v639, 1
        %v702 = vrot.slane %v640, 1
        %v703 = vsel %vm380, %v701, %v702
        %v704 = vrot.slane %v641, 1
        %v705 = vsel %vm380, %v702, %v704
        %v722 = vadd.f32 %v598, %v668
        %v723 = vadd.f32 %v599, %v670
        %v724 = vadd.f32 %v600, %v673
        %v725 = vadd.f32 %v601, %v675
        %v726 = vadd.f32 %v602, %v678
        %v727 = vadd.f32 %v603, %v680
        %v728 = vadd.f32 %v604, %v683
        %v729 = vadd.f32 %v605, %v685
        %v730 = vadd.f32 %v606, %v688
        %v731 = vadd.f32 %v607, %v690
        %v732 = vadd.f32 %v608, %v693
        %v733 = vadd.f32 %v609, %v695
        %v734 = vadd.f32 %v610, %v698
        %v735 = vadd.f32 %v611, %v700
        %v736 = vadd.f32 %v612, %v703
        %v737 = vadd.f32 %v613, %v705
        %v738 = vlaneseq
        %v739 = vshrl.u32 %v738, 7
        %v740 = vsub.s32 5, %v739
        %v741 = vrot.slane %v258, %v740
        %v742 = vmul.f32 %v265, %v741
        %v743 = vmul.f32 %v266, %v741
        %v744 = vmul.f32 %v267, %v741
        %v745 = vmul.f32 %v268, %v741
        %v746 = vmul.f32 %v269, %v741
        %v747 = vmul.f32 %v270, %v741
        %v748 = vmul.f32 %v271, %v741
        %v749 = vmul.f32 %v272, %v741
        %v750 = vmul.f32 %v273, %v741
        %v751 = vmul.f32 %v274, %v741
        %v752 = vmul.f32 %v275, %v741
        %v753 = vmul.f32 %v276, %v741
        %v754 = vmul.f32 %v277, %v741
        %v755 = vmul.f32 %v278, %v741
        %v756 = vmul.f32 %v279, %v741
        %v757 = vmul.f32 %v280, %v741
        %v758 = vmul.f32 %v281, %v741
        %v759 = vmul.f32 %v282, %v741
        %v760 = vmul.f32 %v283, %v741
        %v761 = vmul.f32 %v284, %v741
        %v762 = vmul.f32 %v285, %v741
        %v763 = vmul.f32 %v286, %v741
        %v764 = vmul.f32 %v287, %v741
        %v765 = vmul.f32 %v288, %v741
        %v790 = vrot.slane %v742, 2
        %v791 = vrot.slane %v743, 2
        %v792 = vsel %vm505, %v790, %v791
        %v793 = vrot.slane %v744, 2
        %v794 = vsel %vm505, %v791, %v793
        %v795 = vrot.slane %v745, 2
        %v796 = vrot.slane %v746, 2
        %v797 = vsel %vm505, %v795, %v796
        %v798 = vrot.slane %v747, 2
        %v799 = vsel %vm505, %v796, %v798
        %v800 = vrot.slane %v748, 2
        %v801 = vrot.slane %v749, 2
        %v802 = vsel %vm505, %v800, %v801
        %v803 = vrot.slane %v750, 2
        %v804 = vsel %vm505, %v801, %v803
        %v805 = vrot.slane %v751, 2
        %v806 = vrot.slane %v752, 2
        %v807 = vsel %vm505, %v805, %v806
        %v808 = vrot.slane %v753, 2
        %v809 = vsel %vm505, %v806, %v808
        %v810 = vrot.slane %v754, 2
        %v811 = vrot.slane %v755, 2
        %v812 = vsel %vm505, %v810, %v811
        %v813 = vrot.slane %v756, 2
        %v814 = vsel %vm505, %v811, %v813
        %v815 = vrot.slane %v757, 2
        %v816 = vrot.slane %v758, 2
        %v817 = vsel %vm505, %v815, %v816
        %v818 = vrot.slane %v759, 2
        %v819 = vsel %vm505, %v816, %v818
        %v820 = vrot.slane %v760, 2
        %v821 = vrot.slane %v761, 2
        %v822 = vsel %vm505, %v820, %v821
        %v823 = vrot.slane %v762, 2
        %v824 = vsel %vm505, %v821, %v823
        %v825 = vrot.slane %v763, 2
        %v826 = vrot.slane %v764, 2
        %v827 = vsel %vm505, %v825, %v826
        %v828 = vrot.slane %v765, 2
        %v829 = vsel %vm505, %v826, %v828
        %v846 = vadd.f32 %v722, %v792
        %v847 = vadd.f32 %v723, %v794
        %v848 = vadd.f32 %v724, %v797
        %v849 = vadd.f32 %v725, %v799
        %v850 = vadd.f32 %v726, %v802
        %v851 = vadd.f32 %v727, %v804
        %v852 = vadd.f32 %v728, %v807
        %v853 = vadd.f32 %v729, %v809
        %v854 = vadd.f32 %v730, %v812
        %v855 = vadd.f32 %v731, %v814
        %v856 = vadd.f32 %v732, %v817
        %v857 = vadd.f32 %v733, %v819
        %v858 = vadd.f32 %v734, %v822
        %v859 = vadd.f32 %v735, %v824
        %v860 = vadd.f32 %v736, %v827
        %v861 = vadd.f32 %v737, %v829
        %v862 = vlaneseq
        %v863 = vshrl.u32 %v862, 7
        %v864 = vsub.s32 6, %v863
        %v865 = vrot.slane %v258, %v864
        %v866 = vmul.f32 %v268, %v865
        %v867 = vmul.f32 %v269, %v865
        %v868 = vmul.f32 %v271, %v865
        %v869 = vmul.f32 %v272, %v865
        %v870 = vmul.f32 %v274, %v865
        %v871 = vmul.f32 %v275, %v865
        %v872 = vmul.f32 %v277, %v865
        %v873 = vmul.f32 %v278, %v865
        %v874 = vmul.f32 %v280, %v865
        %v875 = vmul.f32 %v281, %v865
        %v876 = vmul.f32 %v283, %v865
        %v877 = vmul.f32 %v284, %v865
        %v878 = vmul.f32 %v286, %v865
        %v879 = vmul.f32 %v287, %v865
        %v880 = vmul.f32 %v289, %v865
        %v881 = vmul.f32 %v290, %v865
        %v882 = vadd.f32 %v846, %v866
        %v883 = vadd.f32 %v847, %v867
        %v884 = vadd.f32 %v848, %v868
        %v885 = vadd.f32 %v849, %v869
        %v886 = vadd.f32 %v850, %v870
        %v887 = vadd.f32 %v851, %v871
        %v888 = vadd.f32 %v852, %v872
        %v889 = vadd.f32 %v853, %v873
        %v890 = vadd.f32 %v854, %v874
        %v891 = vadd.f32 %v855, %v875
        %v892 = vadd.f32 %v856, %v876
        %v893 = vadd.f32 %v857, %v877
        %v894 = vadd.f32 %v858, %v878
        %v895 = vadd.f32 %v859, %v879
        %v896 = vadd.f32 %v860, %v880
        %v897 = vadd.f32 %v861, %v881
        %v898 = vlaneseq
        %v899 = vshrl.u32 %v898, 7
        %v900 = vsub.s32 7, %v899
        %v901 = vrot.slane %v258, %v900
        %v902 = vmul.f32 %v268, %v901
        %v903 = vmul.f32 %v269, %v901
        %v904 = vmul.f32 %v270, %v901
        %v905 = vmul.f32 %v271, %v901
        %v906 = vmul.f32 %v272, %v901
        %v907 = vmul.f32 %v273, %v901
        %v908 = vmul.f32 %v274, %v901
        %v909 = vmul.f32 %v275, %v901
        %v910 = vmul.f32 %v276, %v901
        %v911 = vmul.f32 %v277, %v901
        %v912 = vmul.f32 %v278, %v901
        %v913 = vmul.f32 %v279, %v901
        %v914 = vmul.f32 %v280, %v901
        %v915 = vmul.f32 %v281, %v901
        %v916 = vmul.f32 %v282, %v901
        %v917 = vmul.f32 %v283, %v901
        %v918 = vmul.f32 %v284, %v901
        %v919 = vmul.f32 %v285, %v901
        %v920 = vmul.f32 %v286, %v901
        %v921 = vmul.f32 %v287, %v901
        %v922 = vmul.f32 %v288, %v901
        %v923 = vmul.f32 %v289, %v901
        %v924 = vmul.f32 %v290, %v901
        %v925 = vmul.f32 %v291, %v901
        %v950 = vrot.slane %v902, 1
        %v951 = vrot.slane %v903, 1
        %v952 = vsel %vm380, %v950, %v951
        %v953 = vrot.slane %v904, 1
        %v954 = vsel %vm380, %v951, %v953
        %v955 = vrot.slane %v905, 1
        %v956 = vrot.slane %v906, 1
        %v957 = vsel %vm380, %v955, %v956
        %v958 = vrot.slane %v907, 1
        %v959 = vsel %vm380, %v956, %v958
        %v960 = vrot.slane %v908, 1
        %v961 = vrot.slane %v909, 1
        %v962 = vsel %vm380, %v960, %v961
        %v963 = vrot.slane %v910, 1
        %v964 = vsel %vm380, %v961, %v963
        %v965 = vrot.slane %v911, 1
        %v966 = vrot.slane %v912, 1
        %v967 = vsel %vm380, %v965, %v966
        %v968 = vrot.slane %v913, 1
        %v969 = vsel %vm380, %v966, %v968
        %v970 = vrot.slane %v914, 1
        %v971 = vrot.slane %v915, 1
        %v972 = vsel %vm380, %v970, %v971
        %v973 = vrot.slane %v916, 1
        %v974 = vsel %vm380, %v971, %v973
        %v975 = vrot.slane %v917, 1
        %v976 = vrot.slane %v918, 1
        %v977 = vsel %vm380, %v975, %v976
        %v978 = vrot.slane %v919, 1
        %v979 = vsel %vm380, %v976, %v978
        %v980 = vrot.slane %v920, 1
        %v981 = vrot.slane %v921, 1
        %v982 = vsel %vm380, %v980, %v981
        %v983 = vrot.slane %v922, 1
        %v984 = vsel %vm380, %v981, %v983
        %v985 = vrot.slane %v923, 1
        %v986 = vrot.slane %v924, 1
        %v987 = vsel %vm380, %v985, %v986
        %v988 = vrot.slane %v925, 1
        %v989 = vsel %vm380, %v986, %v988
        %v1006 = vadd.f32 %v882, %v952
        %v1007 = vadd.f32 %v883, %v954
        %v1008 = vadd.f32 %v884, %v957
        %v1009 = vadd.f32 %v885, %v959
        %v1010 = vadd.f32 %v886, %v962
        %v1011 = vadd.f32 %v887, %v964
        %v1012 = vadd.f32 %v888, %v967
        %v1013 = vadd.f32 %v889, %v969
        %v1014 = vadd.f32 %v890, %v972
        %v1015 = vadd.f32 %v891, %v974
        %v1016 = vadd.f32 %v892, %v977
        %v1017 = vadd.f32 %v893, %v979
        %v1018 = vadd.f32 %v894, %v982
        %v1019 = vadd.f32 %v895, %v984
        %v1020 = vadd.f32 %v896, %v987
        %v1021 = vadd.f32 %v897, %v989
        %v1022 = vlaneseq
        %v1023 = vshrl.u32 %v1022, 7
        %v1024 = vsub.s32 0, %v1023
        %v1025 = vrot.slane %v259, %v1024
        %v1026 = vmul.f32 %v268, %v1025
        %v1027 = vmul.f32 %v269, %v1025
        %v1028 = vmul.f32 %v270, %v1025
        %v1029 = vmul.f32 %v271, %v1025
        %v1030 = vmul.f32 %v272, %v1025
        %v1031 = vmul.f32 %v273, %v1025
        %v1032 = vmul.f32 %v274, %v1025
        %v1033 = vmul.f32 %v275, %v1025
        %v1034 = vmul.f32 %v276, %v1025
        %v1035 = vmul.f32 %v277, %v1025
        %v1036 = vmul.f32 %v278, %v1025
        %v1037 = vmul.f32 %v279, %v1025
        %v1038 = vmul.f32 %v280, %v1025
        %v1039 = vmul.f32 %v281, %v1025
        %v1040 = vmul.f32 %v282, %v1025
        %v1041 = vmul.f32 %v283, %v1025
        %v1042 = vmul.f32 %v284, %v1025
        %v1043 = vmul.f32 %v285, %v1025
        %v1044 = vmul.f32 %v286, %v1025
        %v1045 = vmul.f32 %v287, %v1025
        %v1046 = vmul.f32 %v288, %v1025
        %v1047 = vmul.f32 %v289, %v1025
        %v1048 = vmul.f32 %v290, %v1025
        %v1049 = vmul.f32 %v291, %v1025
        %v1074 = vrot.slane %v1026, 2
        %v1075 = vrot.slane %v1027, 2
        %v1076 = vsel %vm505, %v1074, %v1075
        %v1077 = vrot.slane %v1028, 2
        %v1078 = vsel %vm505, %v1075, %v1077
        %v1079 = vrot.slane %v1029, 2
        %v1080 = vrot.slane %v1030, 2
        %v1081 = vsel %vm505, %v1079, %v1080
        %v1082 = vrot.slane %v1031, 2
        %v1083 = vsel %vm505, %v1080, %v1082
        %v1084 = vrot.slane %v1032, 2
        %v1085 = vrot.slane %v1033, 2
        %v1086 = vsel %vm505, %v1084, %v1085
        %v1087 = vrot.slane %v1034, 2
        %v1088 = vsel %vm505, %v1085, %v1087
        %v1089 = vrot.slane %v1035, 2
        %v1090 = vrot.slane %v1036, 2
        %v1091 = vsel %vm505, %v1089, %v1090
        %v1092 = vrot.slane %v1037, 2
        %v1093 = vsel %vm505, %v1090, %v1092
        %v1094 = vrot.slane %v1038, 2
        %v1095 = vrot.slane %v1039, 2
        %v1096 = vsel %vm505, %v1094, %v1095
        %v1097 = vrot.slane %v1040, 2
        %v1098 = vsel %vm505, %v1095, %v1097
        %v1099 = vrot.slane %v1041, 2
        %v1100 = vrot.slane %v1042, 2
        %v1101 = vsel %vm505, %v1099, %v1100
        %v1102 = vrot.slane %v1043, 2
        %v1103 = vsel %vm505, %v1100, %v1102
        %v1104 = vrot.slane %v1044, 2
        %v1105 = vrot.slane %v1045, 2
        %v1106 = vsel %vm505, %v1104, %v1105
        %v1107 = vrot.slane %v1046, 2
        %v1108 = vsel %vm505, %v1105, %v1107
        %v1109 = vrot.slane %v1047, 2
        %v1110 = vrot.slane %v1048, 2
        %v1111 = vsel %vm505, %v1109, %v1110
        %v1112 = vrot.slane %v1049, 2
        %v1113 = vsel %vm505, %v1110, %v1112
        %v1130 = vadd.f32 %v1006, %v1076
        %v1131 = vadd.f32 %v1007, %v1078
        %v1132 = vadd.f32 %v1008, %v1081
        %v1133 = vadd.f32 %v1009, %v1083
        %v1134 = vadd.f32 %v1010, %v1086
        %v1135 = vadd.f32 %v1011, %v1088
        %v1136 = vadd.f32 %v1012, %v1091
        %v1137 = vadd.f32 %v1013, %v1093
        %v1138 = vadd.f32 %v1014, %v1096
        %v1139 = vadd.f32 %v1015, %v1098
        %v1140 = vadd.f32 %v1016, %v1101
        %v1141 = vadd.f32 %v1017, %v1103
        %v1142 = vadd.f32 %v1018, %v1106
        %v1143 = vadd.f32 %v1019, %v1108
        %v1144 = vadd.f32 %v1020, %v1111
        %v1145 = vadd.f32 %v1021, %v1113
        %s1146 = smul.u32 0, 16
        %s1147 = scalar_lea.vmem %s233, %s1146 [#allocation2]
        %1148 = vst [vmem:[%s1147] sm:$0xff] %v1130
        %1149 = vst [vmem:[%s1147 + $0x8] sm:$0xff] %v1131
        %1150 = vst [vmem:[%s1147 + $0x10] sm:$0xff] %v1132
        %1151 = vst [vmem:[%s1147 + $0x18] sm:$0xff] %v1133
        %1152 = vst [vmem:[%s1147 + $0x20] sm:$0xff] %v1134
        %1153 = vst [vmem:[%s1147 + $0x28] sm:$0xff] %v1135
        %1154 = vst [vmem:[%s1147 + $0x30] sm:$0xff] %v1136
        %1155 = vst [vmem:[%s1147 + $0x38] sm:$0xff] %v1137
        %1156 = vst [vmem:[%s1147 + $0x40] sm:$0xff] %v1138
        %1157 = vst [vmem:[%s1147 + $0x48] sm:$0xff] %v1139
        %1158 = vst [vmem:[%s1147 + $0x50] sm:$0xff] %v1140
        %1159 = vst [vmem:[%s1147 + $0x58] sm:$0xff] %v1141
        %1160 = vst [vmem:[%s1147 + $0x60] sm:$0xff] %v1142
        %1161 = vst [vmem:[%s1147 + $0x68] sm:$0xff] %v1143
        %1162 = vst [vmem:[%s1147 + $0x70] sm:$0xff] %v1144
        %1163 = vst [vmem:[%s1147 + $0x78] sm:$0xff] %v1145
        %v1164 = vadd.f32 %v1130, %v1131
        %v1165 = vadd.f32 %v1164, %v1132
        %v1166 = vadd.f32 %v1165, %v1133
        %v1167 = vadd.f32 %v1166, %v1134
        %v1168 = vadd.f32 %v1167, %v1135
        %v1169 = vadd.f32 %v1168, %v1136
        %v1170 = vadd.f32 %v1169, %v1137
        %v1171 = vadd.f32 %v1170, %v1138
        %v1172 = vadd.f32 %v1171, %v1139
        %v1173 = vadd.f32 %v1172, %v1140
        %v1174 = vadd.f32 %v1173, %v1141
        %v1175 = vadd.f32 %v1174, %v1142
        %v1176 = vadd.f32 %v1175, %v1143
        %v1177 = vadd.f32 %v1176, %v1144
        %v1178 = vadd.f32 %v1177, %v1145
        %v1179 = vrot.slane %v1178, 4
        %v1180 = vadd.f32 %v1178, %v1179
        %v1181 = vrot.slane %v1180, 2
        %v1182 = vadd.f32 %v1180, %v1181
        %v1183 = vrot.slane %v1182, 1
        %v1184 = vadd.f32 %v1182, %v1183
        %v1185 = vadd.f32 %v1184, 0.0
        %v1186 = vmul.f32 %v1130, %v1130
        %v1187 = vmul.f32 %v1131, %v1131
        %v1188 = vmul.f32 %v1132, %v1132
        %v1189 = vmul.f32 %v1133, %v1133
        %v1190 = vmul.f32 %v1134, %v1134
        %v1191 = vmul.f32 %v1135, %v1135
        %v1192 = vmul.f32 %v1136, %v1136
        %v1193 = vmul.f32 %v1137, %v1137
        %v1194 = vmul.f32 %v1138, %v1138
        %v1195 = vmul.f32 %v1139, %v1139
        %v1196 = vmul.f32 %v1140, %v1140
        %v1197 = vmul.f32 %v1141, %v1141
        %v1198 = vmul.f32 %v1142, %v1142
        %v1199 = vmul.f32 %v1143, %v1143
        %v1200 = vmul.f32 %v1144, %v1144
        %v1201 = vmul.f32 %v1145, %v1145
        %v1202 = vadd.f32 %v1186, %v1187
        %v1203 = vadd.f32 %v1202, %v1188
        %v1204 = vadd.f32 %v1203, %v1189
        %v1205 = vadd.f32 %v1204, %v1190
        %v1206 = vadd.f32 %v1205, %v1191
        %v1207 = vadd.f32 %v1206, %v1192
        %v1208 = vadd.f32 %v1207, %v1193
        %v1209 = vadd.f32 %v1208, %v1194
        %v1210 = vadd.f32 %v1209, %v1195
        %v1211 = vadd.f32 %v1210, %v1196
        %v1212 = vadd.f32 %v1211, %v1197
        %v1213 = vadd.f32 %v1212, %v1198
        %v1214 = vadd.f32 %v1213, %v1199
        %v1215 = vadd.f32 %v1214, %v1200
        %v1216 = vadd.f32 %v1215, %v1201
        %v1217 = vrot.slane %v1216, 4
        %v1218 = vadd.f32 %v1216, %v1217
        %v1219 = vrot.slane %v1218, 2
        %v1220 = vadd.f32 %v1218, %v1219
        %v1221 = vrot.slane %v1220, 1
        %v1222 = vadd.f32 %v1220, %v1221
        %v1223 = vadd.f32 %v1222, 0.0
        %s1224 = smul.u32 8, 24
        %s1225 = scalar_lea.vmem %s253, %s1224
        %v1226 = vld [vmem:[%s1225] sm:$0xff]
        %v1227 = vld [vmem:[%s1225 + $0x8] sm:$0xff]
        %v1228 = vld [vmem:[%s1225 + $0x10] sm:$0x3]
        %v1229 = vld [vmem:[%s1225 + $0x18] sm:$0xff]
        %v1230 = vld [vmem:[%s1225 + $0x20] sm:$0xff]
        %v1231 = vld [vmem:[%s1225 + $0x28] sm:$0x3]
        %v1232 = vld [vmem:[%s1225 + $0x30] sm:$0xff]
        %v1233 = vld [vmem:[%s1225 + $0x38] sm:$0xff]
        %v1234 = vld [vmem:[%s1225 + $0x40] sm:$0x3]
        %v1235 = vld [vmem:[%s1225 + $0x48] sm:$0xff]
        %v1236 = vld [vmem:[%s1225 + $0x50] sm:$0xff]
        %v1237 = vld [vmem:[%s1225 + $0x58] sm:$0x3]
        %v1238 = vld [vmem:[%s1225 + $0x60] sm:$0xff]
        %v1239 = vld [vmem:[%s1225 + $0x68] sm:$0xff]
        %v1240 = vld [vmem:[%s1225 + $0x70] sm:$0x3]
        %v1241 = vld [vmem:[%s1225 + $0x78] sm:$0xff]
        %v1242 = vld [vmem:[%s1225 + $0x80] sm:$0xff]
        %v1243 = vld [vmem:[%s1225 + $0x88] sm:$0x3]
        %v1244 = vld [vmem:[%s1225 + $0x90] sm:$0xff]
        %v1245 = vld [vmem:[%s1225 + $0x98] sm:$0xff]
        %v1246 = vld [vmem:[%s1225 + $0xa0] sm:$0x3]
        %v1247 = vld [vmem:[%s1225 + $0xa8] sm:$0xff]
        %v1248 = vld [vmem:[%s1225 + $0xb0] sm:$0xff]
        %v1249 = vld [vmem:[%s1225 + $0xb8] sm:$0x3]
        %v1250 = vld [vmem:[%s1225 + $0xc0] sm:$0xff]
        %v1251 = vld [vmem:[%s1225 + $0xc8] sm:$0xff]
        %v1252 = vld [vmem:[%s1225 + $0xd0] sm:$0x3]
        %v1253 = vld [vmem:[%s1225 + $0xd8] sm:$0xff]
        %v1254 = vld [vmem:[%s1225 + $0xe0] sm:$0xff]
        %v1255 = vld [vmem:[%s1225 + $0xe8] sm:$0x3]
        %v1256 = vmul.f32 %v1226, %v295
        %v1257 = vmul.f32 %v1227, %v295
        %v1258 = vmul.f32 %v1229, %v295
        %v1259 = vmul.f32 %v1230, %v295
        %v1260 = vmul.f32 %v1232, %v295
        %v1261 = vmul.f32 %v1233, %v295
        %v1262 = vmul.f32 %v1235, %v295
        %v1263 = vmul.f32 %v1236, %v295
        %v1264 = vmul.f32 %v1238, %v295
        %v1265 = vmul.f32 %v1239, %v295
        %v1266 = vmul.f32 %v1241, %v295
        %v1267 = vmul.f32 %v1242, %v295
        %v1268 = vmul.f32 %v1244, %v295
        %v1269 = vmul.f32 %v1245, %v295
        %v1270 = vmul.f32 %v1247, %v295
        %v1271 = vmul.f32 %v1248, %v295
        %v1272 = vadd.f32 %v1256, 0.0
        %v1273 = vadd.f32 %v1257, 0.0
        %v1274 = vadd.f32 %v1258, 0.0
        %v1275 = vadd.f32 %v1259, 0.0
        %v1276 = vadd.f32 %v1260, 0.0
        %v1277 = vadd.f32 %v1261, 0.0
        %v1278 = vadd.f32 %v1262, 0.0
        %v1279 = vadd.f32 %v1263, 0.0
        %v1280 = vadd.f32 %v1264, 0.0
        %v1281 = vadd.f32 %v1265, 0.0
        %v1282 = vadd.f32 %v1266, 0.0
        %v1283 = vadd.f32 %v1267, 0.0
        %v1284 = vadd.f32 %v1268, 0.0
        %v1285 = vadd.f32 %v1269, 0.0
        %v1286 = vadd.f32 %v1270, 0.0
        %v1287 = vadd.f32 %v1271, 0.0
        %v1288 = vmul.f32 %v1226, %v331
        %v1289 = vmul.f32 %v1227, %v331
        %v1290 = vmul.f32 %v1228, %v331
        %v1291 = vmul.f32 %v1229, %v331
        %v1292 = vmul.f32 %v1230, %v331
        %v1293 = vmul.f32 %v1231, %v331
        %v1294 = vmul.f32 %v1232, %v331
        %v1295 = vmul.f32 %v1233, %v331
        %v1296 = vmul.f32 %v1234, %v331
        %v1297 = vmul.f32 %v1235, %v331
        %v1298 = vmul.f32 %v1236, %v331
        %v1299 = vmul.f32 %v1237, %v331
        %v1300 = vmul.f32 %v1238, %v331
        %v1301 = vmul.f32 %v1239, %v331
        %v1302 = vmul.f32 %v1240, %v331
        %v1303 = vmul.f32 %v1241, %v331
        %v1304 = vmul.f32 %v1242, %v331
        %v1305 = vmul.f32 %v1243, %v331
        %v1306 = vmul.f32 %v1244, %v331
        %v1307 = vmul.f32 %v1245, %v331
        %v1308 = vmul.f32 %v1246, %v331
        %v1309 = vmul.f32 %v1247, %v331
        %v1310 = vmul.f32 %v1248, %v331
        %v1311 = vmul.f32 %v1249, %v331
        %v1336 = vrot.slane %v1288, 1
        %v1337 = vrot.slane %v1289, 1
        %v1338 = vsel %vm380, %v1336, %v1337
        %v1339 = vrot.slane %v1290, 1
        %v1340 = vsel %vm380, %v1337, %v1339
        %v1341 = vrot.slane %v1291, 1
        %v1342 = vrot.slane %v1292, 1
        %v1343 = vsel %vm380, %v1341, %v1342
        %v1344 = vrot.slane %v1293, 1
        %v1345 = vsel %vm380, %v1342, %v1344
        %v1346 = vrot.slane %v1294, 1
        %v1347 = vrot.slane %v1295, 1
        %v1348 = vsel %vm380, %v1346, %v1347
        %v1349 = vrot.slane %v1296, 1
        %v1350 = vsel %vm380, %v1347, %v1349
        %v1351 = vrot.slane %v1297, 1
        %v1352 = vrot.slane %v1298, 1
        %v1353 = vsel %vm380, %v1351, %v1352
        %v1354 = vrot.slane %v1299, 1
        %v1355 = vsel %vm380, %v1352, %v1354
        %v1356 = vrot.slane %v1300, 1
        %v1357 = vrot.slane %v1301, 1
        %v1358 = vsel %vm380, %v1356, %v1357
        %v1359 = vrot.slane %v1302, 1
        %v1360 = vsel %vm380, %v1357, %v1359
        %v1361 = vrot.slane %v1303, 1
        %v1362 = vrot.slane %v1304, 1
        %v1363 = vsel %vm380, %v1361, %v1362
        %v1364 = vrot.slane %v1305, 1
        %v1365 = vsel %vm380, %v1362, %v1364
        %v1366 = vrot.slane %v1306, 1
        %v1367 = vrot.slane %v1307, 1
        %v1368 = vsel %vm380, %v1366, %v1367
        %v1369 = vrot.slane %v1308, 1
        %v1370 = vsel %vm380, %v1367, %v1369
        %v1371 = vrot.slane %v1309, 1
        %v1372 = vrot.slane %v1310, 1
        %v1373 = vsel %vm380, %v1371, %v1372
        %v1374 = vrot.slane %v1311, 1
        %v1375 = vsel %vm380, %v1372, %v1374
        %v1392 = vadd.f32 %v1272, %v1338
        %v1393 = vadd.f32 %v1273, %v1340
        %v1394 = vadd.f32 %v1274, %v1343
        %v1395 = vadd.f32 %v1275, %v1345
        %v1396 = vadd.f32 %v1276, %v1348
        %v1397 = vadd.f32 %v1277, %v1350
        %v1398 = vadd.f32 %v1278, %v1353
        %v1399 = vadd.f32 %v1279, %v1355
        %v1400 = vadd.f32 %v1280, %v1358
        %v1401 = vadd.f32 %v1281, %v1360
        %v1402 = vadd.f32 %v1282, %v1363
        %v1403 = vadd.f32 %v1283, %v1365
        %v1404 = vadd.f32 %v1284, %v1368
        %v1405 = vadd.f32 %v1285, %v1370
        %v1406 = vadd.f32 %v1286, %v1373
        %v1407 = vadd.f32 %v1287, %v1375
        %v1408 = vmul.f32 %v1226, %v456
        %v1409 = vmul.f32 %v1227, %v456
        %v1410 = vmul.f32 %v1228, %v456
        %v1411 = vmul.f32 %v1229, %v456
        %v1412 = vmul.f32 %v1230, %v456
        %v1413 = vmul.f32 %v1231, %v456
        %v1414 = vmul.f32 %v1232, %v456
        %v1415 = vmul.f32 %v1233, %v456
        %v1416 = vmul.f32 %v1234, %v456
        %v1417 = vmul.f32 %v1235, %v456
        %v1418 = vmul.f32 %v1236, %v456
        %v1419 = vmul.f32 %v1237, %v456
        %v1420 = vmul.f32 %v1238, %v456
        %v1421 = vmul.f32 %v1239, %v456
        %v1422 = vmul.f32 %v1240, %v456
        %v1423 = vmul.f32 %v1241, %v456
        %v1424 = vmul.f32 %v1242, %v456
        %v1425 = vmul.f32 %v1243, %v456
        %v1426 = vmul.f32 %v1244, %v456
        %v1427 = vmul.f32 %v1245, %v456
        %v1428 = vmul.f32 %v1246, %v456
        %v1429 = vmul.f32 %v1247, %v456
        %v1430 = vmul.f32 %v1248, %v456
        %v1431 = vmul.f32 %v1249, %v456
        %v1456 = vrot.slane %v1408, 2
        %v1457 = vrot.slane %v1409, 2
        %v1458 = vsel %vm505, %v1456, %v1457
        %v1459 = vrot.slane %v1410, 2
        %v1460 = vsel %vm505, %v1457, %v1459
        %v1461 = vrot.slane %v1411, 2
        %v1462 = vrot.slane %v1412, 2
        %v1463 = vsel %vm505, %v1461, %v1462
        %v1464 = vrot.slane %v1413, 2
        %v1465 = vsel %vm505, %v1462, %v1464
        %v1466 = vrot.slane %v1414, 2
        %v1467 = vrot.slane %v1415, 2
        %v1468 = vsel %vm505, %v1466, %v1467
        %v1469 = vrot.slane %v1416, 2
        %v1470 = vsel %vm505, %v1467, %v1469
        %v1471 = vrot.slane %v1417, 2
        %v1472 = vrot.slane %v1418, 2
        %v1473 = vsel %vm505, %v1471, %v1472
        %v1474 = vrot.slane %v1419, 2
        %v1475 = vsel %vm505, %v1472, %v1474
        %v1476 = vrot.slane %v1420, 2
        %v1477 = vrot.slane %v1421, 2
        %v1478 = vsel %vm505, %v1476, %v1477
        %v1479 = vrot.slane %v1422, 2
        %v1480 = vsel %vm505, %v1477, %v1479
        %v1481 = vrot.slane %v1423, 2
        %v1482 = vrot.slane %v1424, 2
        %v1483 = vsel %vm505, %v1481, %v1482
        %v1484 = vrot.slane %v1425, 2
        %v1485 = vsel %vm505, %v1482, %v1484
        %v1486 = vrot.slane %v1426, 2
        %v1487 = vrot.slane %v1427, 2
        %v1488 = vsel %vm505, %v1486, %v1487
        %v1489 = vrot.slane %v1428, 2
        %v1490 = vsel %vm505, %v1487, %v1489
        %v1491 = vrot.slane %v1429, 2
        %v1492 = vrot.slane %v1430, 2
        %v1493 = vsel %vm505, %v1491, %v1492
        %v1494 = vrot.slane %v1431, 2
        %v1495 = vsel %vm505, %v1492, %v1494
        %v1512 = vadd.f32 %v1392, %v1458
        %v1513 = vadd.f32 %v1393, %v1460
        %v1514 = vadd.f32 %v1394, %v1463
        %v1515 = vadd.f32 %v1395, %v1465
        %v1516 = vadd.f32 %v1396, %v1468
        %v1517 = vadd.f32 %v1397, %v1470
        %v1518 = vadd.f32 %v1398, %v1473
        %v1519 = vadd.f32 %v1399, %v1475
        %v1520 = vadd.f32 %v1400, %v1478
        %v1521 = vadd.f32 %v1401, %v1480
        %v1522 = vadd.f32 %v1402, %v1483
        %v1523 = vadd.f32 %v1403, %v1485
        %v1524 = vadd.f32 %v1404, %v1488
        %v1525 = vadd.f32 %v1405, %v1490
        %v1526 = vadd.f32 %v1406, %v1493
        %v1527 = vadd.f32 %v1407, %v1495
        %v1528 = vmul.f32 %v1229, %v581
        %v1529 = vmul.f32 %v1230, %v581
        %v1530 = vmul.f32 %v1232, %v581
        %v1531 = vmul.f32 %v1233, %v581
        %v1532 = vmul.f32 %v1235, %v581
        %v1533 = vmul.f32 %v1236, %v581
        %v1534 = vmul.f32 %v1238, %v581
        %v1535 = vmul.f32 %v1239, %v581
        %v1536 = vmul.f32 %v1241, %v581
        %v1537 = vmul.f32 %v1242, %v581
        %v1538 = vmul.f32 %v1244, %v581
        %v1539 = vmul.f32 %v1245, %v581
        %v1540 = vmul.f32 %v1247, %v581
        %v1541 = vmul.f32 %v1248, %v581
        %v1542 = vmul.f32 %v1250, %v581
        %v1543 = vmul.f32 %v1251, %v581
        %v1544 = vadd.f32 %v1512, %v1528
        %v1545 = vadd.f32 %v1513, %v1529
        %v1546 = vadd.f32 %v1514, %v1530
        %v1547 = vadd.f32 %v1515, %v1531
        %v1548 = vadd.f32 %v1516, %v1532
        %v1549 = vadd.f32 %v1517, %v1533
        %v1550 = vadd.f32 %v1518, %v1534
        %v1551 = vadd.f32 %v1519, %v1535
        %v1552 = vadd.f32 %v1520, %v1536
        %v1553 = vadd.f32 %v1521, %v1537
        %v1554 = vadd.f32 %v1522, %v1538
        %v1555 = vadd.f32 %v1523, %v1539
        %v1556 = vadd.f32 %v1524, %v1540
        %v1557 = vadd.f32 %v1525, %v1541
        %v1558 = vadd.f32 %v1526, %v1542
        %v1559 = vadd.f32 %v1527, %v1543
        %v1560 = vmul.f32 %v1229, %v617
        %v1561 = vmul.f32 %v1230, %v617
        %v1562 = vmul.f32 %v1231, %v617
        %v1563 = vmul.f32 %v1232, %v617
        %v1564 = vmul.f32 %v1233, %v617
        %v1565 = vmul.f32 %v1234, %v617
        %v1566 = vmul.f32 %v1235, %v617
        %v1567 = vmul.f32 %v1236, %v617
        %v1568 = vmul.f32 %v1237, %v617
        %v1569 = vmul.f32 %v1238, %v617
        %v1570 = vmul.f32 %v1239, %v617
        %v1571 = vmul.f32 %v1240, %v617
        %v1572 = vmul.f32 %v1241, %v617
        %v1573 = vmul.f32 %v1242, %v617
        %v1574 = vmul.f32 %v1243, %v617
        %v1575 = vmul.f32 %v1244, %v617
        %v1576 = vmul.f32 %v1245, %v617
        %v1577 = vmul.f32 %v1246, %v617
        %v1578 = vmul.f32 %v1247, %v617
        %v1579 = vmul.f32 %v1248, %v617
        %v1580 = vmul.f32 %v1249, %v617
        %v1581 = vmul.f32 %v1250, %v617
        %v1582 = vmul.f32 %v1251, %v617
        %v1583 = vmul.f32 %v1252, %v617
        %v1608 = vrot.slane %v1560, 1
        %v1609 = vrot.slane %v1561, 1
        %v1610 = vsel %vm380, %v1608, %v1609
        %v1611 = vrot.slane %v1562, 1
        %v1612 = vsel %vm380, %v1609, %v1611
        %v1613 = vrot.slane %v1563, 1
        %v1614 = vrot.slane %v1564, 1
        %v1615 = vsel %vm380, %v1613, %v1614
        %v1616 = vrot.slane %v1565, 1
        %v1617 = vsel %vm380, %v1614, %v1616
        %v1618 = vrot.slane %v1566, 1
        %v1619 = vrot.slane %v1567, 1
        %v1620 = vsel %vm380, %v1618, %v1619
        %v1621 = vrot.slane %v1568, 1
        %v1622 = vsel %vm380, %v1619, %v1621
        %v1623 = vrot.slane %v1569, 1
        %v1624 = vrot.slane %v1570, 1
        %v1625 = vsel %vm380, %v1623, %v1624
        %v1626 = vrot.slane %v1571, 1
        %v1627 = vsel %vm380, %v1624, %v1626
        %v1628 = vrot.slane %v1572, 1
        %v1629 = vrot.slane %v1573, 1
        %v1630 = vsel %vm380, %v1628, %v1629
        %v1631 = vrot.slane %v1574, 1
        %v1632 = vsel %vm380, %v1629, %v1631
        %v1633 = vrot.slane %v1575, 1
        %v1634 = vrot.slane %v1576, 1
        %v1635 = vsel %vm380, %v1633, %v1634
        %v1636 = vrot.slane %v1577, 1
        %v1637 = vsel %vm380, %v1634, %v1636
        %v1638 = vrot.slane %v1578, 1
        %v1639 = vrot.slane %v1579, 1
        %v1640 = vsel %vm380, %v1638, %v1639
        %v1641 = vrot.slane %v1580, 1
        %v1642 = vsel %vm380, %v1639, %v1641
        %v1643 = vrot.slane %v1581, 1
        %v1644 = vrot.slane %v1582, 1
        %v1645 = vsel %vm380, %v1643, %v1644
        %v1646 = vrot.slane %v1583, 1
        %v1647 = vsel %vm380, %v1644, %v1646
        %v1664 = vadd.f32 %v1544, %v1610
        %v1665 = vadd.f32 %v1545, %v1612
        %v1666 = vadd.f32 %v1546, %v1615
        %v1667 = vadd.f32 %v1547, %v1617
        %v1668 = vadd.f32 %v1548, %v1620
        %v1669 = vadd.f32 %v1549, %v1622
        %v1670 = vadd.f32 %v1550, %v1625
        %v1671 = vadd.f32 %v1551, %v1627
        %v1672 = vadd.f32 %v1552, %v1630
        %v1673 = vadd.f32 %v1553, %v1632
        %v1674 = vadd.f32 %v1554, %v1635
        %v1675 = vadd.f32 %v1555, %v1637
        %v1676 = vadd.f32 %v1556, %v1640
        %v1677 = vadd.f32 %v1557, %v1642
        %v1678 = vadd.f32 %v1558, %v1645
        %v1679 = vadd.f32 %v1559, %v1647
        %v1680 = vmul.f32 %v1229, %v741
        %v1681 = vmul.f32 %v1230, %v741
        %v1682 = vmul.f32 %v1231, %v741
        %v1683 = vmul.f32 %v1232, %v741
        %v1684 = vmul.f32 %v1233, %v741
        %v1685 = vmul.f32 %v1234, %v741
        %v1686 = vmul.f32 %v1235, %v741
        %v1687 = vmul.f32 %v1236, %v741
        %v1688 = vmul.f32 %v1237, %v741
        %v1689 = vmul.f32 %v1238, %v741
        %v1690 = vmul.f32 %v1239, %v741
        %v1691 = vmul.f32 %v1240, %v741
        %v1692 = vmul.f32 %v1241, %v741
        %v1693 = vmul.f32 %v1242, %v741
        %v1694 = vmul.f32 %v1243, %v741
        %v1695 = vmul.f32 %v1244, %v741
        %v1696 = vmul.f32 %v1245, %v741
        %v1697 = vmul.f32 %v1246, %v741
        %v1698 = vmul.f32 %v1247, %v741
        %v1699 = vmul.f32 %v1248, %v741
        %v1700 = vmul.f32 %v1249, %v741
        %v1701 = vmul.f32 %v1250, %v741
        %v1702 = vmul.f32 %v1251, %v741
        %v1703 = vmul.f32 %v1252, %v741
        %v1728 = vrot.slane %v1680, 2
        %v1729 = vrot.slane %v1681, 2
        %v1730 = vsel %vm505, %v1728, %v1729
        %v1731 = vrot.slane %v1682, 2
        %v1732 = vsel %vm505, %v1729, %v1731
        %v1733 = vrot.slane %v1683, 2
        %v1734 = vrot.slane %v1684, 2
        %v1735 = vsel %vm505, %v1733, %v1734
        %v1736 = vrot.slane %v1685, 2
        %v1737 = vsel %vm505, %v1734, %v1736
        %v1738 = vrot.slane %v1686, 2
        %v1739 = vrot.slane %v1687, 2
        %v1740 = vsel %vm505, %v1738, %v1739
        %v1741 = vrot.slane %v1688, 2
        %v1742 = vsel %vm505, %v1739, %v1741
        %v1743 = vrot.slane %v1689, 2
        %v1744 = vrot.slane %v1690, 2
        %v1745 = vsel %vm505, %v1743, %v1744
        %v1746 = vrot.slane %v1691, 2
        %v1747 = vsel %vm505, %v1744, %v1746
        %v1748 = vrot.slane %v1692, 2
        %v1749 = vrot.slane %v1693, 2
        %v1750 = vsel %vm505, %v1748, %v1749
        %v1751 = vrot.slane %v1694, 2
        %v1752 = vsel %vm505, %v1749, %v1751
        %v1753 = vrot.slane %v1695, 2
        %v1754 = vrot.slane %v1696, 2
        %v1755 = vsel %vm505, %v1753, %v1754
        %v1756 = vrot.slane %v1697, 2
        %v1757 = vsel %vm505, %v1754, %v1756
        %v1758 = vrot.slane %v1698, 2
        %v1759 = vrot.slane %v1699, 2
        %v1760 = vsel %vm505, %v1758, %v1759
        %v1761 = vrot.slane %v1700, 2
        %v1762 = vsel %vm505, %v1759, %v1761
        %v1763 = vrot.slane %v1701, 2
        %v1764 = vrot.slane %v1702, 2
        %v1765 = vsel %vm505, %v1763, %v1764
        %v1766 = vrot.slane %v1703, 2
        %v1767 = vsel %vm505, %v1764, %v1766
        %v1784 = vadd.f32 %v1664, %v1730
        %v1785 = vadd.f32 %v1665, %v1732
        %v1786 = vadd.f32 %v1666, %v1735
        %v1787 = vadd.f32 %v1667, %v1737
        %v1788 = vadd.f32 %v1668, %v1740
        %v1789 = vadd.f32 %v1669, %v1742
        %v1790 = vadd.f32 %v1670, %v1745
        %v1791 = vadd.f32 %v1671, %v1747
        %v1792 = vadd.f32 %v1672, %v1750
        %v1793 = vadd.f32 %v1673, %v1752
        %v1794 = vadd.f32 %v1674, %v1755
        %v1795 = vadd.f32 %v1675, %v1757
        %v1796 = vadd.f32 %v1676, %v1760
        %v1797 = vadd.f32 %v1677, %v1762
        %v1798 = vadd.f32 %v1678, %v1765
        %v1799 = vadd.f32 %v1679, %v1767
        %v1800 = vmul.f32 %v1232, %v865
        %v1801 = vmul.f32 %v1233, %v865
        %v1802 = vmul.f32 %v1235, %v865
        %v1803 = vmul.f32 %v1236, %v865
        %v1804 = vmul.f32 %v1238, %v865
        %v1805 = vmul.f32 %v1239, %v865
        %v1806 = vmul.f32 %v1241, %v865
        %v1807 = vmul.f32 %v1242, %v865
        %v1808 = vmul.f32 %v1244, %v865
        %v1809 = vmul.f32 %v1245, %v865
        %v1810 = vmul.f32 %v1247, %v865
        %v1811 = vmul.f32 %v1248, %v865
        %v1812 = vmul.f32 %v1250, %v865
        %v1813 = vmul.f32 %v1251, %v865
        %v1814 = vmul.f32 %v1253, %v865
        %v1815 = vmul.f32 %v1254, %v865
        %v1816 = vadd.f32 %v1784, %v1800
        %v1817 = vadd.f32 %v1785, %v1801
        %v1818 = vadd.f32 %v1786, %v1802
        %v1819 = vadd.f32 %v1787, %v1803
        %v1820 = vadd.f32 %v1788, %v1804
        %v1821 = vadd.f32 %v1789, %v1805
        %v1822 = vadd.f32 %v1790, %v1806
        %v1823 = vadd.f32 %v1791, %v1807
        %v1824 = vadd.f32 %v1792, %v1808
        %v1825 = vadd.f32 %v1793, %v1809
        %v1826 = vadd.f32 %v1794, %v1810
        %v1827 = vadd.f32 %v1795, %v1811
        %v1828 = vadd.f32 %v1796, %v1812
        %v1829 = vadd.f32 %v1797, %v1813
        %v1830 = vadd.f32 %v1798, %v1814
        %v1831 = vadd.f32 %v1799, %v1815
        %v1832 = vmul.f32 %v1232, %v901
        %v1833 = vmul.f32 %v1233, %v901
        %v1834 = vmul.f32 %v1234, %v901
        %v1835 = vmul.f32 %v1235, %v901
        %v1836 = vmul.f32 %v1236, %v901
        %v1837 = vmul.f32 %v1237, %v901
        %v1838 = vmul.f32 %v1238, %v901
        %v1839 = vmul.f32 %v1239, %v901
        %v1840 = vmul.f32 %v1240, %v901
        %v1841 = vmul.f32 %v1241, %v901
        %v1842 = vmul.f32 %v1242, %v901
        %v1843 = vmul.f32 %v1243, %v901
        %v1844 = vmul.f32 %v1244, %v901
        %v1845 = vmul.f32 %v1245, %v901
        %v1846 = vmul.f32 %v1246, %v901
        %v1847 = vmul.f32 %v1247, %v901
        %v1848 = vmul.f32 %v1248, %v901
        %v1849 = vmul.f32 %v1249, %v901
        %v1850 = vmul.f32 %v1250, %v901
        %v1851 = vmul.f32 %v1251, %v901
        %v1852 = vmul.f32 %v1252, %v901
        %v1853 = vmul.f32 %v1253, %v901
        %v1854 = vmul.f32 %v1254, %v901
        %v1855 = vmul.f32 %v1255, %v901
        %v1880 = vrot.slane %v1832, 1
        %v1881 = vrot.slane %v1833, 1
        %v1882 = vsel %vm380, %v1880, %v1881
        %v1883 = vrot.slane %v1834, 1
        %v1884 = vsel %vm380, %v1881, %v1883
        %v1885 = vrot.slane %v1835, 1
        %v1886 = vrot.slane %v1836, 1
        %v1887 = vsel %vm380, %v1885, %v1886
        %v1888 = vrot.slane %v1837, 1
        %v1889 = vsel %vm380, %v1886, %v1888
        %v1890 = vrot.slane %v1838, 1
        %v1891 = vrot.slane %v1839, 1
        %v1892 = vsel %vm380, %v1890, %v1891
        %v1893 = vrot.slane %v1840, 1
        %v1894 = vsel %vm380, %v1891, %v1893
        %v1895 = vrot.slane %v1841, 1
        %v1896 = vrot.slane %v1842, 1
        %v1897 = vsel %vm380, %v1895, %v1896
        %v1898 = vrot.slane %v1843, 1
        %v1899 = vsel %vm380, %v1896, %v1898
        %v1900 = vrot.slane %v1844, 1
        %v1901 = vrot.slane %v1845, 1
        %v1902 = vsel %vm380, %v1900, %v1901
        %v1903 = vrot.slane %v1846, 1
        %v1904 = vsel %vm380, %v1901, %v1903
        %v1905 = vrot.slane %v1847, 1
        %v1906 = vrot.slane %v1848, 1
        %v1907 = vsel %vm380, %v1905, %v1906
        %v1908 = vrot.slane %v1849, 1
        %v1909 = vsel %vm380, %v1906, %v1908
        %v1910 = vrot.slane %v1850, 1
        %v1911 = vrot.slane %v1851, 1
        %v1912 = vsel %vm380, %v1910, %v1911
        %v1913 = vrot.slane %v1852, 1
        %v1914 = vsel %vm380, %v1911, %v1913
        %v1915 = vrot.slane %v1853, 1
        %v1916 = vrot.slane %v1854, 1
        %v1917 = vsel %vm380, %v1915, %v1916
        %v1918 = vrot.slane %v1855, 1
        %v1919 = vsel %vm380, %v1916, %v1918
        %v1936 = vadd.f32 %v1816, %v1882
        %v1937 = vadd.f32 %v1817, %v1884
        %v1938 = vadd.f32 %v1818, %v1887
        %v1939 = vadd.f32 %v1819, %v1889
        %v1940 = vadd.f32 %v1820, %v1892
        %v1941 = vadd.f32 %v1821, %v1894
        %v1942 = vadd.f32 %v1822, %v1897
        %v1943 = vadd.f32 %v1823, %v1899
        %v1944 = vadd.f32 %v1824, %v1902
        %v1945 = vadd.f32 %v1825, %v1904
        %v1946 = vadd.f32 %v1826, %v1907
        %v1947 = vadd.f32 %v1827, %v1909
        %v1948 = vadd.f32 %v1828, %v1912
        %v1949 = vadd.f32 %v1829, %v1914
        %v1950 = vadd.f32 %v1830, %v1917
        %v1951 = vadd.f32 %v1831, %v1919
        %v1952 = vmul.f32 %v1232, %v1025
        %v1953 = vmul.f32 %v1233, %v1025
        %v1954 = vmul.f32 %v1234, %v1025
        %v1955 = vmul.f32 %v1235, %v1025
        %v1956 = vmul.f32 %v1236, %v1025
        %v1957 = vmul.f32 %v1237, %v1025
        %v1958 = vmul.f32 %v1238, %v1025
        %v1959 = vmul.f32 %v1239, %v1025
        %v1960 = vmul.f32 %v1240, %v1025
        %v1961 = vmul.f32 %v1241, %v1025
        %v1962 = vmul.f32 %v1242, %v1025
        %v1963 = vmul.f32 %v1243, %v1025
        %v1964 = vmul.f32 %v1244, %v1025
        %v1965 = vmul.f32 %v1245, %v1025
        %v1966 = vmul.f32 %v1246, %v1025
        %v1967 = vmul.f32 %v1247, %v1025
        %v1968 = vmul.f32 %v1248, %v1025
        %v1969 = vmul.f32 %v1249, %v1025
        %v1970 = vmul.f32 %v1250, %v1025
        %v1971 = vmul.f32 %v1251, %v1025
        %v1972 = vmul.f32 %v1252, %v1025
        %v1973 = vmul.f32 %v1253, %v1025
        %v1974 = vmul.f32 %v1254, %v1025
        %v1975 = vmul.f32 %v1255, %v1025
        %v2000 = vrot.slane %v1952, 2
        %v2001 = vrot.slane %v1953, 2
        %v2002 = vsel %vm505, %v2000, %v2001
        %v2003 = vrot.slane %v1954, 2
        %v2004 = vsel %vm505, %v2001, %v2003
        %v2005 = vrot.slane %v1955, 2
        %v2006 = vrot.slane %v1956, 2
        %v2007 = vsel %vm505, %v2005, %v2006
        %v2008 = vrot.slane %v1957, 2
        %v2009 = vsel %vm505, %v2006, %v2008
        %v2010 = vrot.slane %v1958, 2
        %v2011 = vrot.slane %v1959, 2
        %v2012 = vsel %vm505, %v2010, %v2011
        %v2013 = vrot.slane %v1960, 2
        %v2014 = vsel %vm505, %v2011, %v2013
        %v2015 = vrot.slane %v1961, 2
        %v2016 = vrot.slane %v1962, 2
        %v2017 = vsel %vm505, %v2015, %v2016
        %v2018 = vrot.slane %v1963, 2
        %v2019 = vsel %vm505, %v2016, %v2018
        %v2020 = vrot.slane %v1964, 2
        %v2021 = vrot.slane %v1965, 2
        %v2022 = vsel %vm505, %v2020, %v2021
        %v2023 = vrot.slane %v1966, 2
        %v2024 = vsel %vm505, %v2021, %v2023
        %v2025 = vrot.slane %v1967, 2
        %v2026 = vrot.slane %v1968, 2
        %v2027 = vsel %vm505, %v2025, %v2026
        %v2028 = vrot.slane %v1969, 2
        %v2029 = vsel %vm505, %v2026, %v2028
        %v2030 = vrot.slane %v1970, 2
        %v2031 = vrot.slane %v1971, 2
        %v2032 = vsel %vm505, %v2030, %v2031
        %v2033 = vrot.slane %v1972, 2
        %v2034 = vsel %vm505, %v2031, %v2033
        %v2035 = vrot.slane %v1973, 2
        %v2036 = vrot.slane %v1974, 2
        %v2037 = vsel %vm505, %v2035, %v2036
        %v2038 = vrot.slane %v1975, 2
        %v2039 = vsel %vm505, %v2036, %v2038
        %v2056 = vadd.f32 %v1936, %v2002
        %v2057 = vadd.f32 %v1937, %v2004
        %v2058 = vadd.f32 %v1938, %v2007
        %v2059 = vadd.f32 %v1939, %v2009
        %v2060 = vadd.f32 %v1940, %v2012
        %v2061 = vadd.f32 %v1941, %v2014
        %v2062 = vadd.f32 %v1942, %v2017
        %v2063 = vadd.f32 %v1943, %v2019
        %v2064 = vadd.f32 %v1944, %v2022
        %v2065 = vadd.f32 %v1945, %v2024
        %v2066 = vadd.f32 %v1946, %v2027
        %v2067 = vadd.f32 %v1947, %v2029
        %v2068 = vadd.f32 %v1948, %v2032
        %v2069 = vadd.f32 %v1949, %v2034
        %v2070 = vadd.f32 %v1950, %v2037
        %v2071 = vadd.f32 %v1951, %v2039
        %s2072 = smul.u32 8, 16
        %s2073 = scalar_lea.vmem %s233, %s2072 [#allocation2]
        %2074 = vst [vmem:[%s2073] sm:$0xff] %v2056
        %2075 = vst [vmem:[%s2073 + $0x8] sm:$0xff] %v2057
        %2076 = vst [vmem:[%s2073 + $0x10] sm:$0xff] %v2058
        %2077 = vst [vmem:[%s2073 + $0x18] sm:$0xff] %v2059
        %2078 = vst [vmem:[%s2073 + $0x20] sm:$0xff] %v2060
        %2079 = vst [vmem:[%s2073 + $0x28] sm:$0xff] %v2061
        %2080 = vst [vmem:[%s2073 + $0x30] sm:$0xff] %v2062
        %2081 = vst [vmem:[%s2073 + $0x38] sm:$0xff] %v2063
        %2082 = vst [vmem:[%s2073 + $0x40] sm:$0xff] %v2064
        %2083 = vst [vmem:[%s2073 + $0x48] sm:$0xff] %v2065
        %2084 = vst [vmem:[%s2073 + $0x50] sm:$0xff] %v2066
        %2085 = vst [vmem:[%s2073 + $0x58] sm:$0xff] %v2067
        %2086 = vst [vmem:[%s2073 + $0x60] sm:$0xff] %v2068
        %2087 = vst [vmem:[%s2073 + $0x68] sm:$0xff] %v2069
        %2088 = vst [vmem:[%s2073 + $0x70] sm:$0xff] %v2070
        %2089 = vst [vmem:[%s2073 + $0x78] sm:$0xff] %v2071
        %v2090 = vadd.f32 %v2056, %v2057
        %v2091 = vadd.f32 %v2090, %v2058
        %v2092 = vadd.f32 %v2091, %v2059
        %v2093 = vadd.f32 %v2092, %v2060
        %v2094 = vadd.f32 %v2093, %v2061
        %v2095 = vadd.f32 %v2094, %v2062
        %v2096 = vadd.f32 %v2095, %v2063
        %v2097 = vadd.f32 %v2096, %v2064
        %v2098 = vadd.f32 %v2097, %v2065
        %v2099 = vadd.f32 %v2098, %v2066
        %v2100 = vadd.f32 %v2099, %v2067
        %v2101 = vadd.f32 %v2100, %v2068
        %v2102 = vadd.f32 %v2101, %v2069
        %v2103 = vadd.f32 %v2102, %v2070
        %v2104 = vadd.f32 %v2103, %v2071
        %v2105 = vrot.slane %v2104, 4
        %v2106 = vadd.f32 %v2104, %v2105
        %v2107 = vrot.slane %v2106, 2
        %v2108 = vadd.f32 %v2106, %v2107
        %v2109 = vrot.slane %v2108, 1
        %v2110 = vadd.f32 %v2108, %v2109
        %v2111 = vadd.f32 %v1185, %v2110
        %v2112 = vmul.f32 %v2056, %v2056
        %v2113 = vmul.f32 %v2057, %v2057
        %v2114 = vmul.f32 %v2058, %v2058
        %v2115 = vmul.f32 %v2059, %v2059
        %v2116 = vmul.f32 %v2060, %v2060
        %v2117 = vmul.f32 %v2061, %v2061
        %v2118 = vmul.f32 %v2062, %v2062
        %v2119 = vmul.f32 %v2063, %v2063
        %v2120 = vmul.f32 %v2064, %v2064
        %v2121 = vmul.f32 %v2065, %v2065
        %v2122 = vmul.f32 %v2066, %v2066
        %v2123 = vmul.f32 %v2067, %v2067
        %v2124 = vmul.f32 %v2068, %v2068
        %v2125 = vmul.f32 %v2069, %v2069
        %v2126 = vmul.f32 %v2070, %v2070
        %v2127 = vmul.f32 %v2071, %v2071
        %v2128 = vadd.f32 %v2112, %v2113
        %v2129 = vadd.f32 %v2128, %v2114
        %v2130 = vadd.f32 %v2129, %v2115
        %v2131 = vadd.f32 %v2130, %v2116
        %v2132 = vadd.f32 %v2131, %v2117
        %v2133 = vadd.f32 %v2132, %v2118
        %v2134 = vadd.f32 %v2133, %v2119
        %v2135 = vadd.f32 %v2134, %v2120
        %v2136 = vadd.f32 %v2135, %v2121
        %v2137 = vadd.f32 %v2136, %v2122
        %v2138 = vadd.f32 %v2137, %v2123
        %v2139 = vadd.f32 %v2138, %v2124
        %v2140 = vadd.f32 %v2139, %v2125
        %v2141 = vadd.f32 %v2140, %v2126
        %v2142 = vadd.f32 %v2141, %v2127
        %v2143 = vrot.slane %v2142, 4
        %v2144 = vadd.f32 %v2142, %v2143
        %v2145 = vrot.slane %v2144, 2
        %v2146 = vadd.f32 %v2144, %v2145
        %v2147 = vrot.slane %v2146, 1
        %v2148 = vadd.f32 %v2146, %v2147
        %v2149 = vadd.f32 %v1223, %v2148
        %2150 = vst [vmem:[%s239] sm:$0x1] %v2111
        %2151 = vst [vmem:[%s245] sm:$0x1] %v2149
        %s2152 = sand.u32 %s98, 1
        %s2153 = scalar_lea.sflag [#allocation3], %s2152
        %s2154 = sand.u32 %s98, 1
        %s2155 = smul.addr %s2154, 256
        %s2156 = scalar_lea.vmem [#allocation2], %s2155
        %s2157 = sand.u32 %s22, 1
        %s2158 = scalar_lea.sflag [#allocation5], %s2157
        %s2159 = sand.u32 %s126, 1
        %s2160 = scalar_lea.vmem [#allocation4], %s2159
        %s2161 = sand.u32 %s22, 1
        %s2162 = scalar_lea.sflag [#allocation5], %s2161
        %s2163 = sand.u32 %s154, 1
        %s2164 = scalar_lea.vmem [#allocation6], %s2163
        // Predicated region
        $region29: #{tpu_custom_call.1} parent=27 // pred_check
          %p2165 = pneg %p108
        $region30: #{tpu_custom_call.1} parent=27 // pred_check_branch
          %2167 = sbr.rel (%p2165) target = $region32
        $region31: #{tpu_custom_call.1} parent=27 // pred_region
          %s2169 = ssub.s32 4096, 4096
          %2170 = vsyncadd %s2153, %s2169
          %s2171 = smul.addr %s27, 32
          %s2172 = sadd.s32 %s26, %s2171
          %s2173 = smul.addr %s2172, 128
          %s2174 = scalar_lea.hbm %s2, %s2173
          %s2175 = sshll.u32 %s2156, 4
          %s2176 = int_to_ptr.vmem [resolvable:$true] %s2175
          %2181 = dma.vmem_to_hbm [thread:$0]  %s2176, 4096, %s2174, %s2153, 128, 128, 8
        $region32: #{tpu_custom_call.1} parent=27 // pred_fallthru
          _
        // Predicated region
        $region33: #{tpu_custom_call.1} parent=27 // pred_check
          %p2182 = pneg %p136
        $region34: #{tpu_custom_call.1} parent=27 // pred_check_branch
          %2184 = sbr.rel (%p2182) target = $region36
        $region35: #{tpu_custom_call.1} parent=27 // pred_region
          %s2186 = ssub.s32 16, 16
          %2187 = vsyncadd %s2158, %s2186
          %s2188 = sadd.s32 %s26, %s27
          %s2189 = smul.addr %s2188, 16
          %s2190 = scalar_lea.hbm %s3, %s2189
          %s2192 = sshll.u32 %s2160, 4
          %s2193 = int_to_ptr.vmem [resolvable:$true] %s2192
          %2195 = dma.vmem_to_hbm [thread:$0]  %s2193, 16, %s2190, %s2158
        $region36: #{tpu_custom_call.1} parent=27 // pred_fallthru
          _
        // Predicated region
        $region37: #{tpu_custom_call.1} parent=27 // pred_check
          %p2196 = pneg %p164
        $region38: #{tpu_custom_call.1} parent=27 // pred_check_branch
          %2198 = sbr.rel (%p2196) target = $region40
        $region39: #{tpu_custom_call.1} parent=27 // pred_region
          %s2200 = ssub.s32 16, 16
          %2201 = vsyncadd %s2162, %s2200
          %s2202 = sadd.s32 %s26, %s27
          %s2203 = smul.addr %s2202, 16
          %s2204 = scalar_lea.hbm %s4, %s2203
          %s2206 = sshll.u32 %s2164, 4
          %s2207 = int_to_ptr.vmem [resolvable:$true] %s2206
          %2209 = dma.vmem_to_hbm [thread:$0]  %s2207, 16, %s2204, %s2162
        $region40: #{tpu_custom_call.1} parent=27 // pred_fallthru
          _
      $region28: #{tpu_custom_call.1} parent=5 // pred_fallthru
        _
      %p2210 = scmp.le.s32.totalorder 2, %s17
      // Predicated region
      $region41: #{tpu_custom_call.1} parent=5 // pred_check
        %p2211 = pneg %p2210
      $region42: #{tpu_custom_call.1} parent=5 // pred_check_branch
        %2213 = sbr.rel (%p2211) target = $region44
      $region43: #{tpu_custom_call.1} parent=5 // pred_region
        %s2214 = ssub.s32 %s17, 2
        // Predicated region
        $region45: #{tpu_custom_call.1} parent=43 // pred_check
          %p2215 = pneg %p114
        $region46: #{tpu_custom_call.1} parent=43 // pred_check_branch
          %2217 = sbr.rel (%p2215) target = $region48
        $region47: #{tpu_custom_call.1} parent=43 // pred_region
          %s2218 = sand.u32 %s99, 1
          %s2219 = scalar_lea.sflag [#allocation3], %s2218
          %s2220 = sand.u32 %s99, 1
          %s2221 = smul.addr %s2220, 256
          %s2222 = scalar_lea.vmem [#allocation2], %s2221
          %2223 = dma.done %s2219, 4096
        $region48: #{tpu_custom_call.1} parent=43 // pred_fallthru
          _
        // Predicated region
        $region49: #{tpu_custom_call.1} parent=43 // pred_check
          %p2224 = pneg %p142
        $region50: #{tpu_custom_call.1} parent=43 // pred_check_branch
          %2226 = sbr.rel (%p2224) target = $region52
        $region51: #{tpu_custom_call.1} parent=43 // pred_region
          %s2227 = sand.u32 %s23, 1
          %s2228 = scalar_lea.sflag [#allocation5], %s2227
          %s2229 = sand.u32 %s127, 1
          %s2230 = scalar_lea.vmem [#allocation4], %s2229
          %2231 = dma.done %s2228, 16
        $region52: #{tpu_custom_call.1} parent=43 // pred_fallthru
          _
        // Predicated region
        $region53: #{tpu_custom_call.1} parent=43 // pred_check
          %p2232 = pneg %p170
        $region54: #{tpu_custom_call.1} parent=43 // pred_check_branch
          %2234 = sbr.rel (%p2232) target = $region56
        $region55: #{tpu_custom_call.1} parent=43 // pred_region
          %s2235 = sand.u32 %s23, 1
          %s2236 = scalar_lea.sflag [#allocation5], %s2235
          %s2237 = sand.u32 %s155, 1
          %s2238 = scalar_lea.vmem [#allocation6], %s2237
          %2239 = dma.done %s2236, 16
        $region56: #{tpu_custom_call.1} parent=43 // pred_fallthru
          _
      $region44: #{tpu_custom_call.1} parent=5 // pred_fallthru
        _
    $region6: #{tpu_custom_call.1} parent=1 // loop_footer
      %s21 = sadd.s32 1, %s17
    $region7: #{tpu_custom_call.1} parent=1 // loop_footer_branch
      %16 = sbr.rel target = $region3
    $region8: #{tpu_custom_call.1} parent=1 // loop_exit
      _
    %2240 = vsyncpa [#allocation3], 1
    %s2241 = scalar_lea.sflag [#allocation3], 1
    %2242 = vsyncpa %s2241, 1
    %2243 = vsyncpa [#allocation5], 1
    %s2244 = scalar_lea.sflag [#allocation5], 1
    %2245 = vsyncpa %s2244, 1

</llo_original>
